<compile_context>
chip_gen: v6e
topology: v6e:2x2x1
jax: 0.10.0
libtpu: 0.0.40
codegen_flags: <defaults>
</compile_context>

<pallas_src>
import numpy as np
import jax
import jax.numpy as jnp
from jax import lax
from jax.experimental import pallas as pl
from jax.experimental.pallas import tpu as pltpu

N_LAYERS = 2          # fixed in the torch module
COS_EPS = 1e-8        # torch.cosine_similarity eps
DEFAULT_TP = 128      # P-axis tile (reduction tile for the user-side updates)


def _pad_axis(x, axis, multiple):
    size = x.shape[axis]
    pad = (-size) % multiple
    if pad == 0:
        return x
    widths = [(0, 0)] * x.ndim
    widths[axis] = (0, pad)
    return jnp.pad(x, widths)


# ----------------------------------------------------------------------------
# Kernel 1a: computer(), user side.
#   grid = (graph g in {plain, NR, FR}, P-reduction tile j)
#   per tile:   u1 += A[:, j] @ p0[j]
#               p1_j = A[:, j]^T @ u0                (lax.dot_general, no A.T)
#               u2 += A[:, j] @ p1_j
#   finalize:   X_user_g = (u0 + u1 + u2) / 3 ;  also emit u1 (needed for the
#               plain-graph post mean in kernel 1b).
# ----------------------------------------------------------------------------
def gcn_user_kernel(a_ref, u0_ref, p0_ref, umean_ref, u1_ref, u1_acc, u2_acc):
    j = pl.program_id(1)
    nj = pl.num_programs(1)

    @pl.when(j == 0)
    def _init():
        u1_acc[...] = jnp.zeros_like(u1_acc)
        u2_acc[...] = jnp.zeros_like(u2_acc)

    a = a_ref[0].astype(jnp.float32)          # (U, tp): bf16 in HBM, f32 on MXU
    u0 = u0_ref[...]                          # (U, E)  resident
    p0 = p0_ref[...]                          # (tp, E)

    # layer 1, user side (accumulated over P tiles)
    u1_acc[...] += jnp.dot(a, p0, preferred_element_type=jnp.float32)

    # layer 1, post side for this tile: A[:, j]^T @ u0 without a host transpose
    p1_j = lax.dot_general(a, u0, (((0,), (0,)), ((), ())),
                           preferred_element_type=jnp.float32)       # (tp, E)

    # layer 2, user side: A[:, j] @ p1_j  (sum over tiles == A @ (A^T @ u0))
    u2_acc[...] += jnp.dot(a, p1_j, preferred_element_type=jnp.float32)

    @pl.when(j == nj - 1)
    def _finalize():
        u1 = u1_acc[...]
        umean_ref[0, :, :] = (u0 + u1 + u2_acc[...]) * (1.0 / float(N_LAYERS + 1))
        u1_ref[0, :, :] = u1


# ----------------------------------------------------------------------------
# Kernel 1b: computer(), post side of the plain graph only (the only post
# output used by forward()).  Tiled over P rows, fully parallel:
#   X_post[j] = (p0[j] + A[:, j]^T @ (u0 + u1)) / 3
# ----------------------------------------------------------------------------
def gcn_post_kernel(a_ref, p0_ref, u01_ref, pmean_ref):
    a = a_ref[0].astype(jnp.float32)                                 # (U, tp)
    acc = lax.dot_general(a, u01_ref[...], (((0,), (0,)), ((), ())),
                          preferred_element_type=jnp.float32)        # (tp, E)
    pmean_ref[...] = (p0_ref[...] + acc) * (1.0 / float(N_LAYERS + 1))


def pallas_computer(A_up, A_up_NR, A_up_FR, users_emb, posts_emb, *,
                    tp=DEFAULT_TP):
    U, P = A_up.shape
    E = users_emb.shape[1]
    f32 = jnp.float32

    tp = P if P <= tp else tp
    # Stacked bf16 adjacency: exact (0/1 values), half the HBM bytes, and no
    # host-side transposes.  In a real model this cast/stack is done once at init.
    a_stack = jnp.stack([A_up, A_up_NR, A_up_FR], axis=0).astype(jnp.bfloat16)
    a_stack = _pad_axis(a_stack, 2, tp)
    p0 = _pad_axis(posts_emb.astype(f32), 0, tp)
    u0 = users_emb.astype(f32)
    P_pad = a_stack.shape[2]
    n_pt = P_pad // tp

    # --- user-side propagation: grid (graph, P-reduction) -------------------
    user_cost = pl.CostEstimate(
        flops=int(2 * 3 * 3 * U * P_pad * E),
        transcendentals=0,
        bytes_accessed=int(a_stack.size * 2 + 3 * P_pad * E * 4 + U * E * 4
                           + 2 * 3 * U * E * 4))
    umean, u1 = pl.pallas_call(
        gcn_user_kernel,
        grid_spec=pltpu.PrefetchScalarGridSpec(
            num_scalar_prefetch=0,
            grid=(3, n_pt),
            in_specs=[
                pl.BlockSpec((1, U, tp), lambda g, j: (g, 0, j)),   # A (bf16)
                pl.BlockSpec((U, E), lambda g, j: (0, 0)),          # u0 resident
                pl.BlockSpec((tp, E), lambda g, j: (j, 0)),         # p0 tile
            ],
            out_specs=[
                pl.BlockSpec((1, U, E), lambda g, j: (g, 0, 0)),    # X_user mean
                pl.BlockSpec((1, U, E), lambda g, j: (g, 0, 0)),    # u1
            ],
            scratch_shapes=[pltpu.VMEM((U, E), f32),
                            pltpu.VMEM((U, E), f32)],
        ),
        out_shape=(jax.ShapeDtypeStruct((3, U, E), f32),
                   jax.ShapeDtypeStruct((3, U, E), f32)),
        compiler_params=pltpu.CompilerParams(
            dimension_semantics=("parallel", "arbitrary")),
        cost_estimate=user_cost,
    )(a_stack, u0, p0)

    # --- post-side mean of the plain graph: tiled over P rows ---------------
    u01 = u0 + u1[0]        # tiny (U, E) glue add:  p1 + p2 = A^T (u0 + u1)
    post_cost = pl.CostEstimate(
        flops=int(2 * U * P_pad * E),
        transcendentals=0,
        bytes_accessed=int(U * P_pad * 2 + 2 * P_pad * E * 4 + U * E * 4))
    pmean = pl.pallas_call(
        gcn_post_kernel,
        grid_spec=pltpu.PrefetchScalarGridSpec(
            num_scalar_prefetch=0,
            grid=(n_pt,),
            in_specs=[
                pl.BlockSpec((1, U, tp), lambda j: (0, 0, j)),      # A_up (bf16)
                pl.BlockSpec((tp, E), lambda j: (j, 0)),            # p0 tile
                pl.BlockSpec((U, E), lambda j: (0, 0)),             # u0+u1 resident
            ],
            out_specs=pl.BlockSpec((tp, E), lambda j: (j, 0)),
        ),
        out_shape=jax.ShapeDtypeStruct((P_pad, E), f32),
        compiler_params=pltpu.CompilerParams(
            dimension_semantics=("parallel",)),
        cost_estimate=post_cost,
    )(a_stack, p0, u01)

    return pmean[:P], umean[0], umean[1], umean[2]


# ----------------------------------------------------------------------------
# Kernel 2 (fused): get_Userembedding + X_source_id / X_rumer_id gathers +
# per-batch aggregation.  grid = (B, K); the id tables are scalar-prefetched
# into SMEM and drive row-gather index_maps.  Outputs accumulate in their
# resident (1, 1, E) VMEM blocks across the K axis.
# ----------------------------------------------------------------------------
def pallas_fused_stage2(X_post_all, X_user, X_user_NR, X_user_FR, W,
                        X_source_id, X_rumer_id):
    P, E = X_post_all.shape
    U = X_user.shape[0]
    B, K = X_rumer_id.shape
    f32 = jnp.float32

    # Singleton middle axis keeps every block's last-two dims equal to the full
    # array dims (satisfies the (8, 128) block-shape rule for row gathers).
    post3 = X_post_all.reshape(P, 1, E)
    xu3 = X_user.reshape(U, 1, E)
    xnr3 = X_user_NR.reshape(U, 1, E)
    xfr3 = X_user_FR.reshape(U, 1, E)
    w3 = W.astype(f32).reshape(U, 1, 2)
    src = X_source_id.astype(jnp.int32)
    rum = X_rumer_id.astype(jnp.int32)

    inv_k = 1.0 / float(K)
    last_k = K - 1
    eps2 = COS_EPS * COS_EPS

    def kernel(src_ref, rum_ref,                       # SMEM prefetch (unused here)
               post_row, xu_row, xnr_row, xfr_row, w_row,
               post_out, mean_out, augmean_out, varuser_out):
        del src_ref, rum_ref                           # gathers done by index_maps
        k = pl.program_id(1)

        xu = xu_row[...]                               # (1, 1, E)
        xnr = xnr_row[...]
        xfr = xfr_row[...]
        w = w_row[...]                                 # (1, 1, 2)

        nu2 = jnp.sum(xu * xu, axis=-1, keepdims=True)
        nnr2 = jnp.sum(xnr * xnr, axis=-1, keepdims=True)
        nfr2 = jnp.sum(xfr * xfr, axis=-1, keepdims=True)
        d_nr = jnp.sum(xu * xnr, axis=-1, keepdims=True)
        d_fr = jnp.sum(xu * xfr, axis=-1, keepdims=True)

        # 1 / max(||x||*||y||, eps) == rsqrt(max(||x||^2*||y||^2, eps^2)):
        # EUP rsqrt instead of sqrt + VPU divide.
        sim_nr = d_nr * lax.rsqrt(jnp.maximum(nu2 * nnr2, eps2))
        sim_fr = d_fr * lax.rsqrt(jnp.maximum(nu2 * nfr2, eps2))

        mx = jnp.maximum(sim_nr, sim_fr)
        a = jnp.where(sim_nr == mx, sim_nr, 0.0)
        b = jnp.where(sim_fr == mx, sim_fr, 0.0)
        var = 0.5 * (a - b) * (a - b)                  # unbiased var of 2 elems

        aug = w[..., 0:1] * xnr + w[..., 1:2] * xfr    # einsum('ab,abc->ac') row
        vxu = var * xu

        @pl.when(k == 0)
        def _init():
            post_out[...] = post_row[...]
            mean_out[...] = xu
            augmean_out[...] = aug
            varuser_out[...] = vxu

        @pl.when(k != 0)
        def _acc():
            mean_out[...] += xu
            augmean_out[...] += aug
            varuser_out[...] += vxu

        @pl.when(k == last_k)
        def _fin():
            mean_out[...] *= inv_k
            augmean_out[...] *= inv_k

    in_specs = [
        pl.BlockSpec((1, 1, E), lambda b, k, src, rum: (src[b], 0, 0)),
        pl.BlockSpec((1, 1, E), lambda b, k, src, rum: (rum[b, k], 0, 0)),
        pl.BlockSpec((1, 1, E), lambda b, k, src, rum: (rum[b, k], 0, 0)),
        pl.BlockSpec((1, 1, E), lambda b, k, src, rum: (rum[b, k], 0, 0)),
        pl.BlockSpec((1, 1, 2), lambda b, k, src, rum: (rum[b, k], 0, 0)),
    ]
    out_spec = pl.BlockSpec((1, 1, E), lambda b, k, src, rum: (b, 0, 0))
    out_shape = tuple(jax.ShapeDtypeStruct((B, 1, E), f32) for _ in range(4))

    outs = pl.pallas_call(
        kernel,
        grid_spec=pltpu.PrefetchScalarGridSpec(
            num_scalar_prefetch=2,
            grid=(B, K),
            in_specs=in_specs,
            out_specs=[out_spec, out_spec, out_spec, out_spec],
        ),
        out_shape=out_shape,
        compiler_params=pltpu.CompilerParams(
            dimension_semantics=("parallel", "arbitrary")),
    )(src, rum, post3, xu3, xnr3, xfr3, w3)

    return tuple(o.reshape(B, E) for o in outs)


# ----------------------------------------------------------------------------
# Full forward
# ----------------------------------------------------------------------------
def forward(params, W, X_source_id, X_user_id, X_rumer_id):
    del X_user_id  # unused in the torch forward
    X_post_all, X_user, X_user_NR, X_user_FR = pallas_computer(
        params["A_up"], params["A_up_NR"], params["A_up_FR"],
        params["user_emb"], params["post_emb"])
    # mask = (X_rumer_id != 0) == 0  -- computed in torch but never used
    X_post, X_mean_user, AugUser_mean, X_var_user = pallas_fused_stage2(
        X_post_all, X_user, X_user_NR, X_user_FR, W, X_source_id, X_rumer_id)
    return X_post, X_mean_user, AugUser_mean, X_var_user


# ----------------------------------------------------------------------------
# Pure-JAX reference (mirrors the torch code) for a correctness check
# ----------------------------------------------------------------------------
def reference_forward(params, W, X_source_id, X_user_id, X_rumer_id):
    del X_user_id
    hp = jax.lax.Precision.HIGHEST
    A_up, A_nr, A_fr = params["A_up"], params["A_up_NR"], params["A_up_FR"]
    u0, p0 = params["user_emb"], params["post_emb"]

    def propagate(A):
        users, posts = [u0], [p0]
        for _ in range(N_LAYERS):
            tu, tp_ = users[-1], posts[-1]
            users.append(jnp.dot(A, tp_, precision=hp))
            posts.append(jnp.dot(A.T, tu, precision=hp))
        return (jnp.mean(jnp.stack(users, 1), 1),
                jnp.mean(jnp.stack(posts, 1), 1))

    X_user, X_post_all = propagate(A_up)
    X_user_NR, _ = propagate(A_nr)
    X_user_FR, _ = propagate(A_fr)

    def cos(x, y):
        num = jnp.sum(x * y, axis=1)
        den = jnp.maximum(jnp.linalg.norm(x, axis=1) * jnp.linalg.norm(y, axis=1),
                          COS_EPS)
        return num / den

    sim_nr, sim_fr = cos(X_user, X_user_NR), cos(X_user, X_user_FR)
    sim = jnp.stack([sim_nr, sim_fr], axis=1)
    mask = sim == jnp.max(sim, axis=1, keepdims=True)
    sim = mask * sim
    user = jnp.stack([X_user_NR, X_user_FR], axis=1)
    AugUser = jnp.einsum("ab,abc->ac", W, user, precision=hp)
    var = jnp.var(sim, axis=1, ddof=1)

    X_post = X_post_all[X_source_id, :]
    xu_g = X_user[X_rumer_id, :]
    var_g = var[X_rumer_id]
    X_var_user = jnp.einsum("ab,abc->ac", var_g, xu_g, precision=hp)
    AugUser_mean = jnp.mean(AugUser[X_rumer_id, :], axis=1)
    X_mean_user = jnp.mean(xu_g, axis=1)
    return X_post, X_mean_user, AugUser_mean, X_var_user


# ----------------------------------------------------------------------------
if __name__ == "__main__":
    key = jax.random.PRNGKey(0)
    ks = jax.random.split(key, 8)

    U, P, E = 128, 256, 128      # num_users, num_posts, embeding_size
    B, K = 8, 4                  # batch, users-per-rumor

    params = {
        # nn.init.normal_(std=0.1) embeddings
        "user_emb": 0.1 * jax.random.normal(ks[0], (U, E), dtype=jnp.float32),
        "post_emb": 0.1 * jax.random.normal(ks[1], (P, E), dtype=jnp.float32),
        # dense bipartite 0/1 graphs (the torch code calls .todense() anyway)
        "A_up":    (jax.random.uniform(ks[2], (U, P)) < 0.3).astype(jnp.float32),
        "A_up_NR": (jax.random.uniform(ks[3], (U, P)) < 0.3).astype(jnp.float32),
        "A_up_FR": (jax.random.uniform(ks[4], (U, P)) < 0.3).astype(jnp.float32),
    }

    W = jax.random.uniform(ks[5], (U, 2), dtype=jnp.float32)
    X_source_id = jax.random.randint(ks[6], (B,), 0, P, dtype=jnp.int32)
    X_rumer_id = jax.random.randint(ks[7], (B, K), 0, U, dtype=jnp.int32)
    X_user_id = jnp.arange(B, dtype=jnp.int32)   # unused by forward

    outs = forward(params, W, X_source_id, X_user_id, X_rumer_id)
    outs = jax.block_until_ready(outs)

    refs = reference_forward(params, W, X_source_id, X_user_id, X_rumer_id)
    for o, r in zip(outs, refs):
        np.testing.assert_allclose(np.asarray(o), np.asarray(r),
                                   rtol=1e-3, atol=1e-3)

    print("KERNEL_OK")
</pallas_src>

<mosaic_0001>
module attributes {stable_mosaic.version = 11 : i64} {
  func.func @gcn_user_kernel(%arg0: i32, %arg1: i32, %arg2: memref<1x128x128xbf16, #tpu.memory_space<vmem>>, %arg3: memref<128x128xf32, #tpu.memory_space<vmem>>, %arg4: memref<128x128xf32, #tpu.memory_space<vmem>>, %arg5: memref<1x128x128xf32, #tpu.memory_space<vmem>>, %arg6: memref<1x128x128xf32, #tpu.memory_space<vmem>>, %arg7: memref<128x128xf32, #tpu.memory_space<vmem>>, %arg8: memref<128x128xf32, #tpu.memory_space<vmem>>) attributes {dimension_semantics = [#tpu.dimension_semantics<parallel>, #tpu.dimension_semantics<arbitrary>], iteration_bounds = array<i64: 3, 2>, scalar_prefetch = 0 : i64, scratch_operands = 2 : i64, tpu.core_type = #tpu.core_type<tc>, window_params = [{transform_indices = @transform_0, window_bounds = array<i64: 1, 128, 128>}, {pipeline_mode = #tpu.pipeline_mode<synchronous>, transform_indices = @transform_1, window_bounds = array<i64: 128, 128>}, {transform_indices = @transform_2, window_bounds = array<i64: 128, 128>}, {transform_indices = @transform_3, window_bounds = array<i64: 1, 128, 128>}, {transform_indices = @transform_4, window_bounds = array<i64: 1, 128, 128>}]} {
    %c0_i32 = arith.constant 0 : i32
    %0 = arith.cmpi eq, %arg1, %c0_i32 : i32
    %1 = arith.extui %0 : i1 to i32
    %c0_i32_0 = arith.constant 0 : i32
    %2 = arith.cmpi ne, %1, %c0_i32_0 : i32
    scf.if %2 {
      %cst_18 = arith.constant 0.000000e+00 : f32
      %20 = vector.broadcast %cst_18 : f32 to vector<128x128xf32>
      %c0_19 = arith.constant 0 : index
      %c0_20 = arith.constant 0 : index
      %21 = vector.load %arg7[%c0_19, %c0_20] : memref<128x128xf32, #tpu.memory_space<vmem>>, vector<128x128xf32>
      tpu.vector_store %arg7[%c0_19, %c0_20], %20 {strides = array<i32>} : memref<128x128xf32, #tpu.memory_space<vmem>>, vector<128x128xf32>,
      %cst_21 = arith.constant 0.000000e+00 : f32
      %22 = vector.broadcast %cst_21 : f32 to vector<128x128xf32>
      %c0_22 = arith.constant 0 : index
      %c0_23 = arith.constant 0 : index
      %23 = vector.load %arg8[%c0_22, %c0_23] : memref<128x128xf32, #tpu.memory_space<vmem>>, vector<128x128xf32>
      tpu.vector_store %arg8[%c0_22, %c0_23], %22 {strides = array<i32>} : memref<128x128xf32, #tpu.memory_space<vmem>>, vector<128x128xf32>,
    } else {
    }
    %c0 = arith.constant 0 : index
    %c0_1 = arith.constant 0 : index
    %c0_2 = arith.constant 0 : index
    %3 = vector.load %arg2[%c0, %c0_1, %c0_2] : memref<1x128x128xbf16, #tpu.memory_space<vmem>>, vector<1x128x128xbf16>
    %4 = vector.shape_cast %3 : vector<1x128x128xbf16> to vector<128x128xbf16>
    %5 = arith.extf %4 : vector<128x128xbf16> to vector<128x128xf32>
    %c0_3 = arith.constant 0 : index
    %c0_4 = arith.constant 0 : index
    %6 = vector.load %arg3[%c0_3, %c0_4] : memref<128x128xf32, #tpu.memory_space<vmem>>, vector<128x128xf32>
    %c0_5 = arith.constant 0 : index
    %c0_6 = arith.constant 0 : index
    %7 = vector.load %arg4[%c0_5, %c0_6] : memref<128x128xf32, #tpu.memory_space<vmem>>, vector<128x128xf32>
    %c0_7 = arith.constant 0 : index
    %c0_8 = arith.constant 0 : index
    %8 = vector.load %arg7[%c0_7, %c0_8] : memref<128x128xf32, #tpu.memory_space<vmem>>, vector<128x128xf32>
    %cst = arith.constant dense<0.000000e+00> : vector<128x128xf32>
    %9 = tpu.matmul %5, %7, %cst {dimension_numbers = #tpu.dot_dimension_numbers<[1], [0], [0], [1], [0, 0, 1, 1], [], []>} : vector<128x128xf32>, vector<128x128xf32>, vector<128x128xf32> -> vector<128x128xf32>
    %10 = arith.addf %8, %9 : vector<128x128xf32>
    %c0_9 = arith.constant 0 : index
    %c0_10 = arith.constant 0 : index
    %11 = vector.load %arg7[%c0_9, %c0_10] : memref<128x128xf32, #tpu.memory_space<vmem>>, vector<128x128xf32>
    tpu.vector_store %arg7[%c0_9, %c0_10], %10 {strides = array<i32>} : memref<128x128xf32, #tpu.memory_space<vmem>>, vector<128x128xf32>,
    %cst_11 = arith.constant dense<0.000000e+00> : vector<128x128xf32>
    %12 = tpu.matmul %5, %6, %cst_11 {dimension_numbers = #tpu.dot_dimension_numbers<[0], [0], [1], [1], [0, 1, 1, 1], [], []>} : vector<128x128xf32>, vector<128x128xf32>, vector<128x128xf32> -> vector<128x128xf32>
    %c0_12 = arith.constant 0 : index
    %c0_13 = arith.constant 0 : index
    %13 = vector.load %arg8[%c0_12, %c0_13] : memref<128x128xf32, #tpu.memory_space<vmem>>, vector<128x128xf32>
    %cst_14 = arith.constant dense<0.000000e+00> : vector<128x128xf32>
    %14 = tpu.matmul %5, %12, %cst_14 {dimension_numbers = #tpu.dot_dimension_numbers<[1], [0], [0], [1], [0, 0, 1, 1], [], []>} : vector<128x128xf32>, vector<128x128xf32>, vector<128x128xf32> -> vector<128x128xf32>
    %15 = arith.addf %13, %14 : vector<128x128xf32>
    %c0_15 = arith.constant 0 : index
    %c0_16 = arith.constant 0 : index
    %16 = vector.load %arg8[%c0_15, %c0_16] : memref<128x128xf32, #tpu.memory_space<vmem>>, vector<128x128xf32>
    tpu.vector_store %arg8[%c0_15, %c0_16], %15 {strides = array<i32>} : memref<128x128xf32, #tpu.memory_space<vmem>>, vector<128x128xf32>,
    %c1_i32 = arith.constant 1 : i32
    %17 = arith.cmpi eq, %arg1, %c1_i32 : i32
    %18 = arith.extui %17 : i1 to i32
    %c0_i32_17 = arith.constant 0 : i32
    %19 = arith.cmpi ne, %18, %c0_i32_17 : i32
    scf.if %19 {
      %c0_18 = arith.constant 0 : index
      %c0_19 = arith.constant 0 : index
      %20 = vector.load %arg7[%c0_18, %c0_19] : memref<128x128xf32, #tpu.memory_space<vmem>>, vector<128x128xf32>
      %21 = arith.addf %6, %20 : vector<128x128xf32>
      %c0_20 = arith.constant 0 : index
      %c0_21 = arith.constant 0 : index
      %22 = vector.load %arg8[%c0_20, %c0_21] : memref<128x128xf32, #tpu.memory_space<vmem>>, vector<128x128xf32>
      %23 = arith.addf %21, %22 : vector<128x128xf32>
      %cst_22 = arith.constant 0.333333343 : f32
      %24 = vector.broadcast %cst_22 : f32 to vector<128x128xf32>
      %25 = arith.mulf %23, %24 : vector<128x128xf32>
      %c0_23 = arith.constant 0 : index
      %c0_24 = arith.constant 0 : index
      %c0_25 = arith.constant 0 : index
      %26 = vector.load %arg5[%c0_23, %c0_24, %c0_25] : memref<1x128x128xf32, #tpu.memory_space<vmem>>, vector<1x128x128xf32>
      %27 = vector.shape_cast %26 : vector<1x128x128xf32> to vector<128x128xf32>
      %28 = vector.shape_cast %25 : vector<128x128xf32> to vector<1x128x128xf32>
      tpu.vector_store %arg5[%c0_23, %c0_24, %c0_25], %28 {strides = array<i32>} : memref<1x128x128xf32, #tpu.memory_space<vmem>>, vector<1x128x128xf32>,
      %c0_26 = arith.constant 0 : index
      %c0_27 = arith.constant 0 : index
      %c0_28 = arith.constant 0 : index
      %29 = vector.load %arg6[%c0_26, %c0_27, %c0_28] : memref<1x128x128xf32, #tpu.memory_space<vmem>>, vector<1x128x128xf32>
      %30 = vector.shape_cast %29 : vector<1x128x128xf32> to vector<128x128xf32>
      %31 = vector.shape_cast %20 : vector<128x128xf32> to vector<1x128x128xf32>
      tpu.vector_store %arg6[%c0_26, %c0_27, %c0_28], %31 {strides = array<i32>} : memref<1x128x128xf32, #tpu.memory_space<vmem>>, vector<1x128x128xf32>,
    } else {
    }
    return
  }
  func.func @transform_0(%arg0: i32, %arg1: i32) -> (i32, i32, i32) {
    %c0_i32 = arith.constant 0 : i32
    %c0_i32_0 = arith.constant 0 : i32
    return %arg0, %c0_i32, %arg1 : i32, i32, i32
  }
  func.func @transform_1(%arg0: i32, %arg1: i32) -> (i32, i32) {
    %c0_i32 = arith.constant 0 : i32
    %c0_i32_0 = arith.constant 0 : i32
    %c0_i32_1 = arith.constant 0 : i32
    return %c0_i32, %c0_i32_0 : i32, i32
  }
  func.func @transform_2(%arg0: i32, %arg1: i32) -> (i32, i32) {
    %c0_i32 = arith.constant 0 : i32
    %c0_i32_0 = arith.constant 0 : i32
    return %arg1, %c0_i32 : i32, i32
  }
  func.func @transform_3(%arg0: i32, %arg1: i32) -> (i32, i32, i32) {
    %c0_i32 = arith.constant 0 : i32
    %c0_i32_0 = arith.constant 0 : i32
    %c0_i32_1 = arith.constant 0 : i32
    return %arg0, %c0_i32, %c0_i32_0 : i32, i32, i32
  }
  func.func @transform_4(%arg0: i32, %arg1: i32) -> (i32, i32, i32) {
    %c0_i32 = arith.constant 0 : i32
    %c0_i32_0 = arith.constant 0 : i32
    %c0_i32_1 = arith.constant 0 : i32
    return %arg0, %c0_i32, %c0_i32_0 : i32, i32, i32
  }
}

</mosaic_0001>

<llo_original>
// kernel: tpu_custom_call.1
$region0: #{tpu_custom_call.1}
  #allocation0 [shape = 'u32[]', space=smem, size = 0x4, offset = 0x4, fixed_abs, tag = 'smem constant byte address 0x4 - core index']
  #allocation1 [shape = 'u32[144,128]{1,0:T(1,128)}', space=vmem, size = 0x12000, scoped, tag = 'internal scratch']
  #allocation2 [shape = 'f32[128,128]{1,0:T(8,128)}', space=vmem, size = 0x10000, scoped, tag = 'scratch operand']
  #allocation3 [shape = 'f32[128,128]{1,0:T(8,128)}', space=vmem, size = 0x10000, scoped, tag = 'scratch operand']
  %s0 = inlined_call_operand.hbm [shape: bf16[3,128,256], index: 0, kind: input, shape index: {}]
  %s1 = inlined_call_operand.hbm [shape: f32[128,128], index: 1, kind: input, shape index: {}]
  %s2 = inlined_call_operand.hbm [shape: f32[256,128], index: 2, kind: input, shape index: {}]
  %s3 = inlined_call_operand.hbm [shape: f32[3,128,128], index: 3, kind: output, shape index: {0}]
  %s4 = inlined_call_operand.hbm [shape: f32[3,128,128], index: 4, kind: output, shape index: {1}]
  %5 = xla_tuple %s3, %s4
  %s6 = sld [smem:[#allocation0]]
  $region73: #{tpu_custom_call.1} parent=0
    _
  %s8 = ssub.s32 1, %s6
  %s9 = scalar_select 0, %s8, %s6
  $region1: #{tpu_custom_call.1} parent=0
    #allocation4 [shape = 'u8[65536]{0}', space=vmem, size = 0x10000, scoped, tag = 'input window, operand 0']
    #allocation5 [shape = 's32[2]{0}', space=sflag, size = 0x8, scoped, tag = 'scoped memory for tpu_custom_call.1']
    #allocation6 [shape = 's32[2]{0}', space=sflag, size = 0x8, scoped, tag = 'scoped memory for tpu_custom_call.1']
    #allocation7 [shape = 'u8[65536]{0}', space=vmem, size = 0x10000, scoped, tag = 'input window, operand 1, single buffered']
    #allocation8 [shape = 's32[1]{0}', space=sflag, size = 0x4, scoped, tag = 'scoped memory for tpu_custom_call.1']
    #allocation9 [shape = 'u8[131072]{0}', space=vmem, size = 0x20000, scoped, tag = 'input window, operand 2']
    #allocation10 [shape = 'u8[131072]{0}', space=vmem, size = 0x20000, scoped, tag = 'output window, operand 0']
    #allocation11 [shape = 'u8[131072]{0}', space=vmem, size = 0x20000, scoped, tag = 'output window, operand 1']
    #allocation12 [shape = 's32[2]{0}', space=sflag, size = 0x8, scoped, tag = 'scoped memory for tpu_custom_call.1']
    %10 = vsyncpa [#allocation5], 0
    %s11 = scalar_lea.sflag [#allocation5], 1
    %12 = vsyncpa %s11, 0
    %13 = vsyncpa [#allocation8], 0
    %14 = vsyncpa [#allocation6], 0
    %s15 = scalar_lea.sflag [#allocation6], 1
    %16 = vsyncpa %s15, 0
    %17 = vsyncpa [#allocation12], 0
    %s18 = scalar_lea.sflag [#allocation12], 1
    %19 = vsyncpa %s18, 0
    loop: start=0, step=1, limit=8
    $region2: #{tpu_custom_call.1} parent=1 // loop_pre_header
      _
    $region3: #{tpu_custom_call.1} parent=1 // loop_header
      %s21 = sphi 0, %s25
      %p22 = scmp.ge.s32.totalorder %s21, 8
      %s28 = sphi 0, %s40
      %s29 = sphi 0, %s36
      %s30 = sphi 0, %s28
      %s31 = sphi 0, %s29
      %s32 = sphi 0, %s30
      %s33 = sphi 0, %s31
      %s45 = sphi 0, %s47
      %s48 = sphi 0, %s45
      %s49 = sphi 0, %s48
      %s65 = sphi 0, %s49
      %s69 = sphi 0, %s69
      %s71 = sphi 0, %s69
      %s72 = sphi 0, %s71
      %s86 = sphi 0, %s72
      %s92 = sphi 0, %s94
      %s95 = sphi 0, %s92
      %s96 = sphi 0, %s95
      %s112 = sphi 0, %s96
      %s118 = sphi 0, %s120
      %s121 = sphi 0, %s118
      %s122 = sphi 0, %s121
      %s138 = sphi 0, %s122
      %s144 = sphi 0, %s146
      %s147 = sphi 0, %s144
      %s148 = sphi 0, %s147
      %s164 = sphi 0, %s148
    $region4: #{tpu_custom_call.1} parent=1 // loop_header_branch
      %24 = sbr.rel (%p22) target = $region8
    $region5: #{tpu_custom_call.1} parent=1 // loop_body
      %s26 = ssub.s32 %s21, 1
      %s27 = ssub.s32 %s21, 2
      %s34 = sadd.s32 1, %s29
      %p35 = scmp.ge.s32.totalorder %s34, 2
      %s36 = scalar_select %p35, 0, %s34
      %s37 = sadd.s32 1, %s28
      %s38 = scalar_select %p35, %s37, %s28
      %p39 = scmp.ge.s32.totalorder %s38, 3
      %s40 = scalar_select %p39, 0, %s38
      %s41 = ssub.s32 %s28, %s40
      %s42 = ssub.s32 %s29, %s36
      %s43 = sor.u32 %s41, %s42
      %p44 = scmp.eq.s32.totalorder %s43, 0
      %s46 = sadd.s32 %s45, 1
      %s47 = scalar_select %p44, %s45, %s46
      %p50 = pneg %p44
      %p51 = scmp.eq.s32.totalorder %s21, 5
      %p52 = por %p50, %p51
      %p53 = scmp.ne.s32.totalorder %s45, %s48
      %p54 = scmp.eq.s32.totalorder %s21, 0
      %p55 = por %p53, %p54
      %p56 = scmp.ne.s32.totalorder %s45, %s48
      %p57 = scmp.eq.s32.totalorder %s26, 5
      %p58 = por %p56, %p57
      %p59 = scmp.ne.s32.totalorder %s48, %s49
      %p60 = scmp.eq.s32.totalorder %s26, 0
      %p61 = por %p59, %p60
      %p62 = scmp.ne.s32.totalorder %s48, %s49
      %p63 = scmp.eq.s32.totalorder %s27, 5
      %p64 = por %p62, %p63
      %p66 = scmp.ne.s32.totalorder %s49, %s65
      %p67 = scmp.eq.s32.totalorder %s27, 0
      %p68 = por %p66, %p67
      %s70 = sadd.s32 %s69, 1
      %p73 = scmp.eq.s32.totalorder %s21, 5
      %p74 = scmp.ne.s32.totalorder %s69, %s71
      %p75 = scmp.eq.s32.totalorder %s21, 0
      %p76 = por %p74, %p75
      %p77 = scmp.ne.s32.totalorder %s69, %s71
      %p78 = scmp.eq.s32.totalorder %s26, 5
      %p79 = por %p77, %p78
      %p80 = scmp.ne.s32.totalorder %s71, %s72
      %p81 = scmp.eq.s32.totalorder %s26, 0
      %p82 = por %p80, %p81
      %p83 = scmp.ne.s32.totalorder %s71, %s72
      %p84 = scmp.eq.s32.totalorder %s27, 5
      %p85 = por %p83, %p84
      %p87 = scmp.ne.s32.totalorder %s72, %s86
      %p88 = scmp.eq.s32.totalorder %s27, 0
      %p89 = por %p87, %p88
      %s90 = ssub.s32 %s29, %s36
      %p91 = scmp.eq.s32.totalorder %s90, 0
      %s93 = sadd.s32 %s92, 1
      %s94 = scalar_select %p91, %s92, %s93
      %p97 = pneg %p91
      %p98 = scmp.eq.s32.totalorder %s21, 5
      %p99 = por %p97, %p98
      %p100 = scmp.ne.s32.totalorder %s92, %s95
      %p101 = scmp.eq.s32.totalorder %s21, 0
      %p102 = por %p100, %p101
      %p103 = scmp.ne.s32.totalorder %s92, %s95
      %p104 = scmp.eq.s32.totalorder %s26, 5
      %p105 = por %p103, %p104
      %p106 = scmp.ne.s32.totalorder %s95, %s96
      %p107 = scmp.eq.s32.totalorder %s26, 0
      %p108 = por %p106, %p107
      %p109 = scmp.ne.s32.totalorder %s95, %s96
      %p110 = scmp.eq.s32.totalorder %s27, 5
      %p111 = por %p109, %p110
      %p113 = scmp.ne.s32.totalorder %s96, %s112
      %p114 = scmp.eq.s32.totalorder %s27, 0
      %p115 = por %p113, %p114
      %s116 = ssub.s32 %s28, %s40
      %p117 = scmp.eq.s32.totalorder %s116, 0
      %s119 = sadd.s32 %s118, 1
      %s120 = scalar_select %p117, %s118, %s119
      %p123 = pneg %p117
      %p124 = scmp.eq.s32.totalorder %s21, 5
      %p125 = por %p123, %p124
      %p126 = scmp.ne.s32.totalorder %s118, %s121
      %p127 = scmp.eq.s32.totalorder %s21, 0
      %p128 = por %p126, %p127
      %p129 = scmp.ne.s32.totalorder %s118, %s121
      %p130 = scmp.eq.s32.totalorder %s26, 5
      %p131 = por %p129, %p130
      %p132 = scmp.ne.s32.totalorder %s121, %s122
      %p133 = scmp.eq.s32.totalorder %s26, 0
      %p134 = por %p132, %p133
      %p135 = scmp.ne.s32.totalorder %s121, %s122
      %p136 = scmp.eq.s32.totalorder %s27, 5
      %p137 = por %p135, %p136
      %p139 = scmp.ne.s32.totalorder %s122, %s138
      %p140 = scmp.eq.s32.totalorder %s27, 0
      %p141 = por %p139, %p140
      %s142 = ssub.s32 %s28, %s40
      %p143 = scmp.eq.s32.totalorder %s142, 0
      %s145 = sadd.s32 %s144, 1
      %s146 = scalar_select %p143, %s144, %s145
      %p149 = pneg %p143
      %p150 = scmp.eq.s32.totalorder %s21, 5
      %p151 = por %p149, %p150
      %p152 = scmp.ne.s32.totalorder %s144, %s147
      %p153 = scmp.eq.s32.totalorder %s21, 0
      %p154 = por %p152, %p153
      %p155 = scmp.ne.s32.totalorder %s144, %s147
      %p156 = scmp.eq.s32.totalorder %s26, 5
      %p157 = por %p155, %p156
      %p158 = scmp.ne.s32.totalorder %s147, %s148
      %p159 = scmp.eq.s32.totalorder %s26, 0
      %p160 = por %p158, %p159
      %p161 = scmp.ne.s32.totalorder %s147, %s148
      %p162 = scmp.eq.s32.totalorder %s27, 5
      %p163 = por %p161, %p162
      %p165 = scmp.ne.s32.totalorder %s148, %s164
      %p166 = scmp.eq.s32.totalorder %s27, 0
      %p167 = por %p165, %p166
      %p168 = scmp.le.s32.totalorder 1, %s21
      %p169 = scmp.lt.s32.totalorder %s21, 7
      %p170 = pnand %p168, %p169
      %p171 = pneg %p170
      // Predicated region
      $region9: #{tpu_custom_call.1} parent=5 // pred_check
        _
      $region10: #{tpu_custom_call.1} parent=5 // pred_check_branch
        %173 = sbr.rel (%p170) target = $region12
      $region11: #{tpu_custom_call.1} parent=5 // pred_region
        %s174 = ssub.s32 %s21, 1
        // Predicated region
        $region13: #{tpu_custom_call.1} parent=11 // pred_check
          %p175 = pneg %p82
        $region14: #{tpu_custom_call.1} parent=11 // pred_check_branch
          %177 = sbr.rel (%p175) target = $region16
        $region15: #{tpu_custom_call.1} parent=11 // pred_region
          %s179 = ssub.s32 2048, 2048
          %180 = vsyncadd [#allocation8], %s179
          %s181 = sshll.u32 [#allocation7], 4
          %s182 = int_to_ptr.vmem [resolvable:$true] %s181
          %187 = dma.hbm_to_vmem [thread:$0]  %s1, 2048, %s182, [#allocation8], 128, 128, 8
        $region16: #{tpu_custom_call.1} parent=11 // pred_fallthru
          _
      $region12: #{tpu_custom_call.1} parent=5 // pred_fallthru
        _
      %p188 = scmp.lt.s32.totalorder %s21, 6
      // Predicated region
      $region17: #{tpu_custom_call.1} parent=5 // pred_check
        %p189 = pneg %p188
      $region18: #{tpu_custom_call.1} parent=5 // pred_check_branch
        %191 = sbr.rel (%p189) target = $region20
      $region19: #{tpu_custom_call.1} parent=5 // pred_region
        // Predicated region
        $region21: #{tpu_custom_call.1} parent=19 // pred_check
          %p192 = pneg %p55
        $region22: #{tpu_custom_call.1} parent=19 // pred_check_branch
          %194 = sbr.rel (%p192) target = $region24
        $region23: #{tpu_custom_call.1} parent=19 // pred_region
          %s195 = sand.u32 %s21, 1
          %s196 = scalar_lea.sflag [#allocation5], %s195
          %s197 = sand.u32 %s45, 1
          %s198 = smul.addr %s197, 64
          %s199 = scalar_lea.vmem [#allocation4], %s198
          %s201 = ssub.s32 1024, 1024
          %202 = vsyncadd %s196, %s201
          %s203 = smul.addr %s28, 32
          %s204 = sadd.s32 %s29, %s203
          %s205 = smul.addr %s204, 64
          %s206 = scalar_lea.hbm %s0, %s205
          %s207 = sshll.u32 %s199, 4
          %s208 = int_to_ptr.vmem [resolvable:$true] %s207
          %213 = dma.hbm_to_vmem [thread:$0]  %s206, 1024, %s208, %s196, 128, 64, 4
        $region24: #{tpu_custom_call.1} parent=19 // pred_fallthru
          _
        // Predicated region
        $region25: #{tpu_custom_call.1} parent=19 // pred_check
          %p214 = pneg %p102
        $region26: #{tpu_custom_call.1} parent=19 // pred_check_branch
          %216 = sbr.rel (%p214) target = $region28
        $region27: #{tpu_custom_call.1} parent=19 // pred_region
          %s217 = sand.u32 %s21, 1
          %s218 = scalar_lea.sflag [#allocation5], %s217
          %s219 = sand.u32 %s92, 1
          %s220 = smul.addr %s219, 128
          %s221 = scalar_lea.vmem [#allocation9], %s220
          %s222 = smul.u32 16, %s29
          %s224 = ssub.s32 2048, 2048
          %225 = vsyncadd %s218, %s224
          %s226 = smul.addr %s222, 128
          %s227 = scalar_lea.hbm %s2, %s226
          %s228 = sshll.u32 %s221, 4
          %s229 = int_to_ptr.vmem [resolvable:$true] %s228
          %234 = dma.hbm_to_vmem [thread:$0]  %s227, 2048, %s229, %s218, 128, 128, 8
        $region28: #{tpu_custom_call.1} parent=19 // pred_fallthru
          _
      $region20: #{tpu_custom_call.1} parent=5 // pred_fallthru
        _
      %p235 = scmp.le.s32.totalorder 1, %s21
      %p236 = scmp.lt.s32.totalorder %s21, 7
      %p237 = pnand %p235, %p236
      %p238 = pneg %p237
      // Predicated region
      $region29: #{tpu_custom_call.1} parent=5 // pred_check
        _
      $region30: #{tpu_custom_call.1} parent=5 // pred_check_branch
        %240 = sbr.rel (%p237) target = $region32
      $region31: #{tpu_custom_call.1} parent=5 // pred_region
        %s241 = ssub.s32 %s21, 1
        %s242 = sand.u32 %s26, 1
        %s243 = scalar_lea.sflag [#allocation5], %s242
        %s244 = sand.u32 %s48, 1
        %s245 = smul.addr %s244, 64
        %s246 = scalar_lea.vmem [#allocation4], %s245
        // Predicated region
        $region33: #{tpu_custom_call.1} parent=31 // pred_check
          %p247 = pneg %p61
        $region34: #{tpu_custom_call.1} parent=31 // pred_check_branch
          %249 = sbr.rel (%p247) target = $region36
        $region35: #{tpu_custom_call.1} parent=31 // pred_region
          %250 = dma.done %s243, 1024
        $region36: #{tpu_custom_call.1} parent=31 // pred_fallthru
          _
        // Predicated region
        $region37: #{tpu_custom_call.1} parent=31 // pred_check
          %p251 = pneg %p82
        $region38: #{tpu_custom_call.1} parent=31 // pred_check_branch
          %253 = sbr.rel (%p251) target = $region40
        $region39: #{tpu_custom_call.1} parent=31 // pred_region
          %254 = dma.done [#allocation8], 2048
        $region40: #{tpu_custom_call.1} parent=31 // pred_fallthru
          _
        %s255 = sand.u32 %s26, 1
        %s256 = scalar_lea.sflag [#allocation5], %s255
        %s257 = sand.u32 %s95, 1
        %s258 = smul.addr %s257, 128
        %s259 = scalar_lea.vmem [#allocation9], %s258
        // Predicated region
        $region41: #{tpu_custom_call.1} parent=31 // pred_check
          %p260 = pneg %p108
        $region42: #{tpu_custom_call.1} parent=31 // pred_check_branch
          %262 = sbr.rel (%p260) target = $region44
        $region43: #{tpu_custom_call.1} parent=31 // pred_region
          %263 = dma.done %s256, 2048
        $region44: #{tpu_custom_call.1} parent=31 // pred_fallthru
          _
        %s264 = sand.u32 %s26, 1
        %s265 = scalar_lea.sflag [#allocation5], %s264
        %s266 = sand.u32 %s48, 1
        %s267 = smul.addr %s266, 64
        %s268 = scalar_lea.vmem [#allocation4], %s267
        %p269 = pneg %p61
        %p270 = pneg %p58
        %p271 = pneg %p82
        %p272 = pneg %p79
        %s273 = sand.u32 %s26, 1
        %s274 = scalar_lea.sflag [#allocation5], %s273
        %s275 = sand.u32 %s95, 1
        %s276 = smul.addr %s275, 128
        %s277 = scalar_lea.vmem [#allocation9], %s276
        %p278 = pneg %p108
        %p279 = pneg %p105
        %p280 = pneg %p134
        %p281 = pneg %p131
        %s282 = sand.u32 %s121, 1
        %s283 = scalar_lea.sflag [#allocation6], %s282
        %s284 = sand.u32 %s121, 1
        %s285 = smul.addr %s284, 128
        %s286 = scalar_lea.vmem [#allocation10], %s285
        %p287 = pneg %p160
        %p288 = pneg %p157
        %s289 = sand.u32 %s147, 1
        %s290 = scalar_lea.sflag [#allocation12], %s289
        %s291 = sand.u32 %s147, 1
        %s292 = smul.addr %s291, 128
        %s293 = scalar_lea.vmem [#allocation11], %s292
        %s294 = smul.u32 16, %s31
        %p295 = scmp.eq.s32.totalorder %s31, 0
        // Predicated region
        $region45: #{tpu_custom_call.1} parent=31 // pred_check
          %p296 = pneg %p295
        $region46: #{tpu_custom_call.1} parent=31 // pred_check_branch
          %298 = sbr.rel (%p296) target = $region48
        $region47: #{tpu_custom_call.1} parent=31 // pred_region
          %299 = vst [vmem:[#allocation2] sm:$0xff] 0.0
          %300 = vst [vmem:[#allocation2 + $0x8] sm:$0xff] 0.0
          %301 = vst [vmem:[#allocation2 + $0x10] sm:$0xff] 0.0
          %302 = vst [vmem:[#allocation2 + $0x18] sm:$0xff] 0.0
          %303 = vst [vmem:[#allocation2 + $0x20] sm:$0xff] 0.0
          %304 = vst [vmem:[#allocation2 + $0x28] sm:$0xff] 0.0
          %305 = vst [vmem:[#allocation2 + $0x30] sm:$0xff] 0.0
          %306 = vst [vmem:[#allocation2 + $0x38] sm:$0xff] 0.0
          %307 = vst [vmem:[#allocation2 + $0x40] sm:$0xff] 0.0
          %308 = vst [vmem:[#allocation2 + $0x48] sm:$0xff] 0.0
          %309 = vst [vmem:[#allocation2 + $0x50] sm:$0xff] 0.0
          %310 = vst [vmem:[#allocation2 + $0x58] sm:$0xff] 0.0
          %311 = vst [vmem:[#allocation2 + $0x60] sm:$0xff] 0.0
          %312 = vst [vmem:[#allocation2 + $0x68] sm:$0xff] 0.0
          %313 = vst [vmem:[#allocation2 + $0x70] sm:$0xff] 0.0
          %314 = vst [vmem:[#allocation2 + $0x78] sm:$0xff] 0.0
          %315 = vst [vmem:[#allocation3] sm:$0xff] 0.0
          %316 = vst [vmem:[#allocation3 + $0x8] sm:$0xff] 0.0
          %317 = vst [vmem:[#allocation3 + $0x10] sm:$0xff] 0.0
          %318 = vst [vmem:[#allocation3 + $0x18] sm:$0xff] 0.0
          %319 = vst [vmem:[#allocation3 + $0x20] sm:$0xff] 0.0
          %320 = vst [vmem:[#allocation3 + $0x28] sm:$0xff] 0.0
          %321 = vst [vmem:[#allocation3 + $0x30] sm:$0xff] 0.0
          %322 = vst [vmem:[#allocation3 + $0x38] sm:$0xff] 0.0
          %323 = vst [vmem:[#allocation3 + $0x40] sm:$0xff] 0.0
          %324 = vst [vmem:[#allocation3 + $0x48] sm:$0xff] 0.0
          %325 = vst [vmem:[#allocation3 + $0x50] sm:$0xff] 0.0
          %326 = vst [vmem:[#allocation3 + $0x58] sm:$0xff] 0.0
          %327 = vst [vmem:[#allocation3 + $0x60] sm:$0xff] 0.0
          %328 = vst [vmem:[#allocation3 + $0x68] sm:$0xff] 0.0
          %329 = vst [vmem:[#allocation3 + $0x70] sm:$0xff] 0.0
          %330 = vst [vmem:[#allocation3 + $0x78] sm:$0xff] 0.0
        $region48: #{tpu_custom_call.1} parent=31 // pred_fallthru
          _
        %v331 = vld [vmem:[%s246] sm:$0xf]
        %v332 = vld [vmem:[%s246 + $0x4] sm:$0xf]
        %v333 = vld [vmem:[%s246 + $0x8] sm:$0xf]
        %v334 = vld [vmem:[%s246 + $0xc] sm:$0xf]
        %v335 = vld [vmem:[%s246 + $0x10] sm:$0xf]
        %v336 = vld [vmem:[%s246 + $0x14] sm:$0xf]
        %v337 = vld [vmem:[%s246 + $0x18] sm:$0xf]
        %v338 = vld [vmem:[%s246 + $0x1c] sm:$0xf]
        %v339 = vld [vmem:[%s246 + $0x20] sm:$0xf]
        %v340 = vld [vmem:[%s246 + $0x24] sm:$0xf]
        %v341 = vld [vmem:[%s246 + $0x28] sm:$0xf]
        %v342 = vld [vmem:[%s246 + $0x2c] sm:$0xf]
        %v343 = vld [vmem:[%s246 + $0x30] sm:$0xf]
        %v344 = vld [vmem:[%s246 + $0x34] sm:$0xf]
        %v345 = vld [vmem:[%s246 + $0x38] sm:$0xf]
        %v346 = vld [vmem:[%s246 + $0x3c] sm:$0xf]
        %v347 = vunpack.c.l.bf16 %v331
        %v348 = vunpack.c.l.bf16 %v332
        %v349 = vunpack.c.l.bf16 %v333
        %v350 = vunpack.c.l.bf16 %v334
        %v351 = vunpack.c.l.bf16 %v335
        %v352 = vunpack.c.l.bf16 %v336
        %v353 = vunpack.c.l.bf16 %v337
        %v354 = vunpack.c.l.bf16 %v338
        %v355 = vunpack.c.l.bf16 %v339
        %v356 = vunpack.c.l.bf16 %v340
        %v357 = vunpack.c.l.bf16 %v341
        %v358 = vunpack.c.l.bf16 %v342
        %v359 = vunpack.c.l.bf16 %v343
        %v360 = vunpack.c.l.bf16 %v344
        %v361 = vunpack.c.l.bf16 %v345
        %v362 = vunpack.c.l.bf16 %v346
        %v363 = vld [vmem:[#allocation7] sm:$0xff]
        %v364 = vld [vmem:[#allocation7 + $0x8] sm:$0xff]
        %v365 = vld [vmem:[#allocation7 + $0x10] sm:$0xff]
        %v366 = vld [vmem:[#allocation7 + $0x18] sm:$0xff]
        %v367 = vld [vmem:[#allocation7 + $0x20] sm:$0xff]
        %v368 = vld [vmem:[#allocation7 + $0x28] sm:$0xff]
        %v369 = vld [vmem:[#allocation7 + $0x30] sm:$0xff]
        %v370 = vld [vmem:[#allocation7 + $0x38] sm:$0xff]
        %v371 = vld [vmem:[#allocation7 + $0x40] sm:$0xff]
        %v372 = vld [vmem:[#allocation7 + $0x48] sm:$0xff]
        %v373 = vld [vmem:[#allocation7 + $0x50] sm:$0xff]
        %v374 = vld [vmem:[#allocation7 + $0x58] sm:$0xff]
        %v375 = vld [vmem:[#allocation7 + $0x60] sm:$0xff]
        %v376 = vld [vmem:[#allocation7 + $0x68] sm:$0xff]
        %v377 = vld [vmem:[#allocation7 + $0x70] sm:$0xff]
        %v378 = vld [vmem:[#allocation7 + $0x78] sm:$0xff]
        %v379 = vld [vmem:[%s259] sm:$0xff]
        %v380 = vld [vmem:[%s259 + $0x8] sm:$0xff]
        %v381 = vld [vmem:[%s259 + $0x10] sm:$0xff]
        %v382 = vld [vmem:[%s259 + $0x18] sm:$0xff]
        %v383 = vld [vmem:[%s259 + $0x20] sm:$0xff]
        %v384 = vld [vmem:[%s259 + $0x28] sm:$0xff]
        %v385 = vld [vmem:[%s259 + $0x30] sm:$0xff]
        %v386 = vld [vmem:[%s259 + $0x38] sm:$0xff]
        %v387 = vld [vmem:[%s259 + $0x40] sm:$0xff]
        %v388 = vld [vmem:[%s259 + $0x48] sm:$0xff]
        %v389 = vld [vmem:[%s259 + $0x50] sm:$0xff]
        %v390 = vld [vmem:[%s259 + $0x58] sm:$0xff]
        %v391 = vld [vmem:[%s259 + $0x60] sm:$0xff]
        %v392 = vld [vmem:[%s259 + $0x68] sm:$0xff]
        %v393 = vld [vmem:[%s259 + $0x70] sm:$0xff]
        %v394 = vld [vmem:[%s259 + $0x78] sm:$0xff]
        %v395 = vld [vmem:[#allocation2] sm:$0xff]
        %v396 = vld [vmem:[#allocation2 + $0x8] sm:$0xff]
        %v397 = vld [vmem:[#allocation2 + $0x10] sm:$0xff]
        %v398 = vld [vmem:[#allocation2 + $0x18] sm:$0xff]
        %v399 = vld [vmem:[#allocation2 + $0x20] sm:$0xff]
        %v400 = vld [vmem:[#allocation2 + $0x28] sm:$0xff]
        %v401 = vld [vmem:[#allocation2 + $0x30] sm:$0xff]
        %v402 = vld [vmem:[#allocation2 + $0x38] sm:$0xff]
        %v403 = vld [vmem:[#allocation2 + $0x40] sm:$0xff]
        %v404 = vld [vmem:[#allocation2 + $0x48] sm:$0xff]
        %v405 = vld [vmem:[#allocation2 + $0x50] sm:$0xff]
        %v406 = vld [vmem:[#allocation2 + $0x58] sm:$0xff]
        %v407 = vld [vmem:[#allocation2 + $0x60] sm:$0xff]
        %v408 = vld [vmem:[#allocation2 + $0x68] sm:$0xff]
        %v409 = vld [vmem:[#allocation2 + $0x70] sm:$0xff]
        %v410 = vld [vmem:[#allocation2 + $0x78] sm:$0xff]
        %411 = vmatprep.subr.mxu0 0.0
        %412 = vmatpush1.msra.mxu0 %v394
        %413 = vmatprep.subr.mxu0 0.0
        %414 = vmatpush1.msra.mxu0 %v393
        %415 = vmatprep.subr.mxu0 0.0
        %416 = vmatpush1.msra.mxu0 %v392
        %417 = vmatprep.subr.mxu0 0.0
        %418 = vmatpush1.msra.mxu0 %v391
        %419 = vmatprep.subr.mxu0 0.0
        %420 = vmatpush1.msra.mxu0 %v390
        %421 = vmatprep.subr.mxu0 0.0
        %422 = vmatpush1.msra.mxu0 %v389
        %423 = vmatprep.subr.mxu0 0.0
        %424 = vmatpush1.msra.mxu0 %v388
        %425 = vmatprep.subr.mxu0 0.0
        %426 = vmatpush1.msra.mxu0 %v387
        %427 = vmatprep.subr.mxu0 0.0
        %428 = vmatpush1.msra.mxu0 %v386
        %429 = vmatprep.subr.mxu0 0.0
        %430 = vmatpush1.msra.mxu0 %v385
        %431 = vmatprep.subr.mxu0 0.0
        %432 = vmatpush1.msra.mxu0 %v384
        %433 = vmatprep.subr.mxu0 0.0
        %434 = vmatpush1.msra.mxu0 %v383
        %435 = vmatprep.subr.mxu0 0.0
        %436 = vmatpush1.msra.mxu0 %v382
        %437 = vmatprep.subr.mxu0 0.0
        %438 = vmatpush1.msra.mxu0 %v381
        %439 = vmatprep.subr.mxu0 0.0
        %440 = vmatpush1.msra.mxu0 %v380
        %441 = vmatprep.subr.mxu0 0.0
        %442 = vmatpush1.msra.mxu0 %v379
        %443 = vmatprep.subr.mxu0 0.0
        %444 = vmatpush2.msra.mxu0 0.0
        %445 = vmatprep.subr.mxu0 0.0
        %446 = vmatpush2.msra.mxu0 0.0
        %447 = vmatprep.subr.mxu0 0.0
        %448 = vmatpush2.msra.mxu0 0.0
        %449 = vmatprep.subr.mxu0 0.0
        %450 = vmatpush2.msra.mxu0 0.0
        %451 = vmatprep.subr.mxu0 0.0
        %452 = vmatpush2.msra.mxu0 0.0
        %453 = vmatprep.subr.mxu0 0.0
        %454 = vmatpush2.msra.mxu0 0.0
        %455 = vmatprep.subr.mxu0 0.0
        %456 = vmatpush2.msra.mxu0 0.0
        %457 = vmatprep.subr.mxu0 0.0
        %458 = vmatpush2.msra.mxu0 0.0
        %459 = vmatprep.subr.mxu0 0.0
        %460 = vmatpush2.msra.mxu0 0.0
        %461 = vmatprep.subr.mxu0 0.0
        %462 = vmatpush2.msra.mxu0 0.0
        %463 = vmatprep.subr.mxu0 0.0
        %464 = vmatpush2.msra.mxu0 0.0
        %465 = vmatprep.subr.mxu0 0.0
        %466 = vmatpush2.msra.mxu0 0.0
        %467 = vmatprep.subr.mxu0 0.0
        %468 = vmatpush2.msra.mxu0 0.0
        %469 = vmatprep.subr.mxu0 0.0
        %470 = vmatpush2.msra.mxu0 0.0
        %471 = vmatprep.subr.mxu0 0.0
        %472 = vmatpush2.msra.mxu0 0.0
        %473 = vmatprep.subr.mxu0 0.0
        %474 = vmatpush2.msra.mxu0 0.0
        %475 = vmatprep.mubr.f32.mxu0 0.0
        %476 = vmatmul.mubr.f32.gmra.mxu0 %v347
        %v477 = vpop.f32.mrf.mxu0
        %v478 = vadd.f32 0.0, %v477
        %v479 = vpop.f32.mrf.mxu0
        %480 = vmatprep.mubr.f32.mxu0 0.0
        %481 = vmatmul.mubr.f32.gmra.mxu0 %v348
        %v482 = vpop.f32.mrf.mxu0
        %v483 = vadd.f32 0.0, %v482
        %v484 = vpop.f32.mrf.mxu0
        %485 = vmatprep.mubr.f32.mxu0 0.0
        %486 = vmatmul.mubr.f32.gmra.mxu0 %v349
        %v487 = vpop.f32.mrf.mxu0
        %v488 = vadd.f32 0.0, %v487
        %v489 = vpop.f32.mrf.mxu0
        %490 = vmatprep.mubr.f32.mxu0 0.0
        %491 = vmatmul.mubr.f32.gmra.mxu0 %v350
        %v492 = vpop.f32.mrf.mxu0
        %v493 = vadd.f32 0.0, %v492
        %v494 = vpop.f32.mrf.mxu0
        %495 = vmatprep.mubr.f32.mxu0 0.0
        %496 = vmatmul.mubr.f32.gmra.mxu0 %v351
        %v497 = vpop.f32.mrf.mxu0
        %v498 = vadd.f32 0.0, %v497
        %v499 = vpop.f32.mrf.mxu0
        %500 = vmatprep.mubr.f32.mxu0 0.0
        %501 = vmatmul.mubr.f32.gmra.mxu0 %v352
        %v502 = vpop.f32.mrf.mxu0
        %v503 = vadd.f32 0.0, %v502
        %v504 = vpop.f32.mrf.mxu0
        %505 = vmatprep.mubr.f32.mxu0 0.0
        %506 = vmatmul.mubr.f32.gmra.mxu0 %v353
        %v507 = vpop.f32.mrf.mxu0
        %v508 = vadd.f32 0.0, %v507
        %v509 = vpop.f32.mrf.mxu0
        %510 = vmatprep.mubr.f32.mxu0 0.0
        %511 = vmatmul.mubr.f32.gmra.mxu0 %v354
        %v512 = vpop.f32.mrf.mxu0
        %v513 = vadd.f32 0.0, %v512
        %v514 = vpop.f32.mrf.mxu0
        %515 = vmatprep.mubr.f32.mxu0 0.0
        %516 = vmatmul.mubr.f32.gmra.mxu0 %v355
        %v517 = vpop.f32.mrf.mxu0
        %v518 = vadd.f32 0.0, %v517
        %v519 = vpop.f32.mrf.mxu0
        %520 = vmatprep.mubr.f32.mxu0 0.0
        %521 = vmatmul.mubr.f32.gmra.mxu0 %v356
        %v522 = vpop.f32.mrf.mxu0
        %v523 = vadd.f32 0.0, %v522
        %v524 = vpop.f32.mrf.mxu0
        %525 = vmatprep.mubr.f32.mxu0 0.0
        %526 = vmatmul.mubr.f32.gmra.mxu0 %v357
        %v527 = vpop.f32.mrf.mxu0
        %v528 = vadd.f32 0.0, %v527
        %v529 = vpop.f32.mrf.mxu0
        %530 = vmatprep.mubr.f32.mxu0 0.0
        %531 = vmatmul.mubr.f32.gmra.mxu0 %v358
        %v532 = vpop.f32.mrf.mxu0
        %v533 = vadd.f32 0.0, %v532
        %v534 = vpop.f32.mrf.mxu0
        %535 = vmatprep.mubr.f32.mxu0 0.0
        %536 = vmatmul.mubr.f32.gmra.mxu0 %v359
        %v537 = vpop.f32.mrf.mxu0
        %v538 = vadd.f32 0.0, %v537
        %v539 = vpop.f32.mrf.mxu0
        %540 = vmatprep.mubr.f32.mxu0 0.0
        %541 = vmatmul.mubr.f32.gmra.mxu0 %v360
        %v542 = vpop.f32.mrf.mxu0
        %v543 = vadd.f32 0.0, %v542
        %v544 = vpop.f32.mrf.mxu0
        %545 = vmatprep.mubr.f32.mxu0 0.0
        %546 = vmatmul.mubr.f32.gmra.mxu0 %v361
        %v547 = vpop.f32.mrf.mxu0
        %v548 = vadd.f32 0.0, %v547
        %v549 = vpop.f32.mrf.mxu0
        %550 = vmatprep.mubr.f32.mxu0 0.0
        %551 = vmatmul.mubr.f32.gmra.mxu0 %v362
        %v552 = vpop.f32.mrf.mxu0
        %v553 = vadd.f32 0.0, %v552
        %v554 = vpop.f32.mrf.mxu0
        %555 = vdwg.mxu0
        %v556 = vadd.f32 %v395, %v478
        %v557 = vadd.f32 %v396, %v483
        %v558 = vadd.f32 %v397, %v488
        %v559 = vadd.f32 %v398, %v493
        %v560 = vadd.f32 %v399, %v498
        %v561 = vadd.f32 %v400, %v503
        %v562 = vadd.f32 %v401, %v508
        %v563 = vadd.f32 %v402, %v513
        %v564 = vadd.f32 %v403, %v518
        %v565 = vadd.f32 %v404, %v523
        %v566 = vadd.f32 %v405, %v528
        %v567 = vadd.f32 %v406, %v533
        %v568 = vadd.f32 %v407, %v538
        %v569 = vadd.f32 %v408, %v543
        %v570 = vadd.f32 %v409, %v548
        %v571 = vadd.f32 %v410, %v553
        %572 = vst [vmem:[#allocation2] sm:$0xff] %v556
        %573 = vst [vmem:[#allocation2 + $0x8] sm:$0xff] %v557
        %574 = vst [vmem:[#allocation2 + $0x10] sm:$0xff] %v558
        %575 = vst [vmem:[#allocation2 + $0x18] sm:$0xff] %v559
        %576 = vst [vmem:[#allocation2 + $0x20] sm:$0xff] %v560
        %577 = vst [vmem:[#allocation2 + $0x28] sm:$0xff] %v561
        %578 = vst [vmem:[#allocation2 + $0x30] sm:$0xff] %v562
        %579 = vst [vmem:[#allocation2 + $0x38] sm:$0xff] %v563
        %580 = vst [vmem:[#allocation2 + $0x40] sm:$0xff] %v564
        %581 = vst [vmem:[#allocation2 + $0x48] sm:$0xff] %v565
        %582 = vst [vmem:[#allocation2 + $0x50] sm:$0xff] %v566
        %583 = vst [vmem:[#allocation2 + $0x58] sm:$0xff] %v567
        %584 = vst [vmem:[#allocation2 + $0x60] sm:$0xff] %v568
        %585 = vst [vmem:[#allocation2 + $0x68] sm:$0xff] %v569
        %586 = vst [vmem:[#allocation2 + $0x70] sm:$0xff] %v570
        %587 = vst [vmem:[#allocation2 + $0x78] sm:$0xff] %v571
        %588 = vxpose.xlu0.b32.start [1/16] %v347, 128
        %589 = vxpose.xlu0.b32.cont [2/16] %v348, 128
        %590 = vxpose.xlu0.b32.cont [3/16] %v349, 128
        %591 = vxpose.xlu0.b32.cont [4/16] %v350, 128
        %592 = vxpose.xlu0.b32.cont [5/16] %v351, 128
        %593 = vxpose.xlu0.b32.cont [6/16] %v352, 128
        %594 = vxpose.xlu0.b32.cont [7/16] %v353, 128
        %595 = vxpose.xlu0.b32.cont [8/16] %v354, 128
        %596 = vxpose.xlu0.b32.cont [9/16] %v355, 128
        %597 = vxpose.xlu0.b32.cont [10/16] %v356, 128
        %598 = vxpose.xlu0.b32.cont [11/16] %v357, 128
        %599 = vxpose.xlu0.b32.cont [12/16] %v358, 128
        %600 = vxpose.xlu0.b32.cont [13/16] %v359, 128
        %601 = vxpose.xlu0.b32.cont [14/16] %v360, 128
        %602 = vxpose.xlu0.b32.cont [15/16] %v361, 128
        %603 = vxpose.xlu0.b32.end [16/16] %v362, 128
        %v604 = vpop.trf.xlu0
        %v605 = vpop.trf.xlu0
        %v606 = vpop.trf.xlu0
        %v607 = vpop.trf.xlu0
        %v608 = vpop.trf.xlu0
        %v609 = vpop.trf.xlu0
        %v610 = vpop.trf.xlu0
        %v611 = vpop.trf.xlu0
        %v612 = vpop.trf.xlu0
        %v613 = vpop.trf.xlu0
        %v614 = vpop.trf.xlu0
        %v615 = vpop.trf.xlu0
        %v616 = vpop.trf.xlu0
        %v617 = vpop.trf.xlu0
        %v618 = vpop.trf.xlu0
        %v619 = vpop.trf.xlu0
        %620 = vmatprep.subr.mxu0 0.0
        %621 = vmatpush1.msra.mxu0 %v378
        %622 = vmatprep.subr.mxu0 0.0
        %623 = vmatpush1.msra.mxu0 %v377
        %624 = vmatprep.subr.mxu0 0.0
        %625 = vmatpush1.msra.mxu0 %v376
        %626 = vmatprep.subr.mxu0 0.0
        %627 = vmatpush1.msra.mxu0 %v375
        %628 = vmatprep.subr.mxu0 0.0
        %629 = vmatpush1.msra.mxu0 %v374
        %630 = vmatprep.subr.mxu0 0.0
        %631 = vmatpush1.msra.mxu0 %v373
        %632 = vmatprep.subr.mxu0 0.0
        %633 = vmatpush1.msra.mxu0 %v372
        %634 = vmatprep.subr.mxu0 0.0
        %635 = vmatpush1.msra.mxu0 %v371
        %636 = vmatprep.subr.mxu0 0.0
        %637 = vmatpush1.msra.mxu0 %v370
        %638 = vmatprep.subr.mxu0 0.0
        %639 = vmatpush1.msra.mxu0 %v369
        %640 = vmatprep.subr.mxu0 0.0
        %641 = vmatpush1.msra.mxu0 %v368
        %642 = vmatprep.subr.mxu0 0.0
        %643 = vmatpush1.msra.mxu0 %v367
        %644 = vmatprep.subr.mxu0 0.0
        %645 = vmatpush1.msra.mxu0 %v366
        %646 = vmatprep.subr.mxu0 0.0
        %647 = vmatpush1.msra.mxu0 %v365
        %648 = vmatprep.subr.mxu0 0.0
        %649 = vmatpush1.msra.mxu0 %v364
        %650 = vmatprep.subr.mxu0 0.0
        %651 = vmatpush1.msra.mxu0 %v363
        %652 = vmatprep.subr.mxu0 0.0
        %653 = vmatpush2.msra.mxu0 0.0
        %654 = vmatprep.subr.mxu0 0.0
        %655 = vmatpush2.msra.mxu0 0.0
        %656 = vmatprep.subr.mxu0 0.0
        %657 = vmatpush2.msra.mxu0 0.0
        %658 = vmatprep.subr.mxu0 0.0
        %659 = vmatpush2.msra.mxu0 0.0
        %660 = vmatprep.subr.mxu0 0.0
        %661 = vmatpush2.msra.mxu0 0.0
        %662 = vmatprep.subr.mxu0 0.0
        %663 = vmatpush2.msra.mxu0 0.0
        %664 = vmatprep.subr.mxu0 0.0
        %665 = vmatpush2.msra.mxu0 0.0
        %666 = vmatprep.subr.mxu0 0.0
        %667 = vmatpush2.msra.mxu0 0.0
        %668 = vmatprep.subr.mxu0 0.0
        %669 = vmatpush2.msra.mxu0 0.0
        %670 = vmatprep.subr.mxu0 0.0
        %671 = vmatpush2.msra.mxu0 0.0
        %672 = vmatprep.subr.mxu0 0.0
        %673 = vmatpush2.msra.mxu0 0.0
        %674 = vmatprep.subr.mxu0 0.0
        %675 = vmatpush2.msra.mxu0 0.0
        %676 = vmatprep.subr.mxu0 0.0
        %677 = vmatpush2.msra.mxu0 0.0
        %678 = vmatprep.subr.mxu0 0.0
        %679 = vmatpush2.msra.mxu0 0.0
        %680 = vmatprep.subr.mxu0 0.0
        %681 = vmatpush2.msra.mxu0 0.0
        %682 = vmatprep.subr.mxu0 0.0
        %683 = vmatpush2.msra.mxu0 0.0
        %684 = vmatprep.mubr.f32.mxu0 0.0
        %685 = vmatmul.mubr.f32.gmra.mxu0 %v604
        %v686 = vpop.f32.mrf.mxu0
        %v687 = vadd.f32 0.0, %v686
        %v688 = vpop.f32.mrf.mxu0
        %689 = vmatprep.mubr.f32.mxu0 0.0
        %690 = vmatmul.mubr.f32.gmra.mxu0 %v605
        %v691 = vpop.f32.mrf.mxu0
        %v692 = vadd.f32 0.0, %v691
        %v693 = vpop.f32.mrf.mxu0
        %694 = vmatprep.mubr.f32.mxu0 0.0
        %695 = vmatmul.mubr.f32.gmra.mxu0 %v606
        %v696 = vpop.f32.mrf.mxu0
        %v697 = vadd.f32 0.0, %v696
        %v698 = vpop.f32.mrf.mxu0
        %699 = vmatprep.mubr.f32.mxu0 0.0
        %700 = vmatmul.mubr.f32.gmra.mxu0 %v607
        %v701 = vpop.f32.mrf.mxu0
        %v702 = vadd.f32 0.0, %v701
        %v703 = vpop.f32.mrf.mxu0
        %704 = vmatprep.mubr.f32.mxu0 0.0
        %705 = vmatmul.mubr.f32.gmra.mxu0 %v608
        %v706 = vpop.f32.mrf.mxu0
        %v707 = vadd.f32 0.0, %v706
        %v708 = vpop.f32.mrf.mxu0
        %709 = vmatprep.mubr.f32.mxu0 0.0
        %710 = vmatmul.mubr.f32.gmra.mxu0 %v609
        %v711 = vpop.f32.mrf.mxu0
        %v712 = vadd.f32 0.0, %v711
        %v713 = vpop.f32.mrf.mxu0
        %714 = vmatprep.mubr.f32.mxu0 0.0
        %715 = vmatmul.mubr.f32.gmra.mxu0 %v610
        %v716 = vpop.f32.mrf.mxu0
        %v717 = vadd.f32 0.0, %v716
        %v718 = vpop.f32.mrf.mxu0
        %719 = vmatprep.mubr.f32.mxu0 0.0
        %720 = vmatmul.mubr.f32.gmra.mxu0 %v611
        %v721 = vpop.f32.mrf.mxu0
        %v722 = vadd.f32 0.0, %v721
        %v723 = vpop.f32.mrf.mxu0
        %724 = vmatprep.mubr.f32.mxu0 0.0
        %725 = vmatmul.mubr.f32.gmra.mxu0 %v612
        %v726 = vpop.f32.mrf.mxu0
        %v727 = vadd.f32 0.0, %v726
        %v728 = vpop.f32.mrf.mxu0
        %729 = vmatprep.mubr.f32.mxu0 0.0
        %730 = vmatmul.mubr.f32.gmra.mxu0 %v613
        %v731 = vpop.f32.mrf.mxu0
        %v732 = vadd.f32 0.0, %v731
        %v733 = vpop.f32.mrf.mxu0
        %734 = vmatprep.mubr.f32.mxu0 0.0
        %735 = vmatmul.mubr.f32.gmra.mxu0 %v614
        %v736 = vpop.f32.mrf.mxu0
        %v737 = vadd.f32 0.0, %v736
        %v738 = vpop.f32.mrf.mxu0
        %739 = vmatprep.mubr.f32.mxu0 0.0
        %740 = vmatmul.mubr.f32.gmra.mxu0 %v615
        %v741 = vpop.f32.mrf.mxu0
        %v742 = vadd.f32 0.0, %v741
        %v743 = vpop.f32.mrf.mxu0
        %744 = vmatprep.mubr.f32.mxu0 0.0
        %745 = vmatmul.mubr.f32.gmra.mxu0 %v616
        %v746 = vpop.f32.mrf.mxu0
        %v747 = vadd.f32 0.0, %v746
        %v748 = vpop.f32.mrf.mxu0
        %749 = vmatprep.mubr.f32.mxu0 0.0
        %750 = vmatmul.mubr.f32.gmra.mxu0 %v617
        %v751 = vpop.f32.mrf.mxu0
        %v752 = vadd.f32 0.0, %v751
        %v753 = vpop.f32.mrf.mxu0
        %754 = vmatprep.mubr.f32.mxu0 0.0
        %755 = vmatmul.mubr.f32.gmra.mxu0 %v618
        %v756 = vpop.f32.mrf.mxu0
        %v757 = vadd.f32 0.0, %v756
        %v758 = vpop.f32.mrf.mxu0
        %759 = vmatprep.mubr.f32.mxu0 0.0
        %760 = vmatmul.mubr.f32.gmra.mxu0 %v619
        %v761 = vpop.f32.mrf.mxu0
        %v762 = vadd.f32 0.0, %v761
        %v763 = vpop.f32.mrf.mxu0
        %764 = vdwg.mxu0
        %v765 = vld [vmem:[#allocation3] sm:$0xff]
        %v766 = vld [vmem:[#allocation3 + $0x8] sm:$0xff]
        %v767 = vld [vmem:[#allocation3 + $0x10] sm:$0xff]
        %v768 = vld [vmem:[#allocation3 + $0x18] sm:$0xff]
        %v769 = vld [vmem:[#allocation3 + $0x20] sm:$0xff]
        %v770 = vld [vmem:[#allocation3 + $0x28] sm:$0xff]
        %v771 = vld [vmem:[#allocation3 + $0x30] sm:$0xff]
        %v772 = vld [vmem:[#allocation3 + $0x38] sm:$0xff]
        %v773 = vld [vmem:[#allocation3 + $0x40] sm:$0xff]
        %v774 = vld [vmem:[#allocation3 + $0x48] sm:$0xff]
        %v775 = vld [vmem:[#allocation3 + $0x50] sm:$0xff]
        %v776 = vld [vmem:[#allocation3 + $0x58] sm:$0xff]
        %v777 = vld [vmem:[#allocation3 + $0x60] sm:$0xff]
        %v778 = vld [vmem:[#allocation3 + $0x68] sm:$0xff]
        %v779 = vld [vmem:[#allocation3 + $0x70] sm:$0xff]
        %v780 = vld [vmem:[#allocation3 + $0x78] sm:$0xff]
        %781 = vmatprep.subr.mxu0 0.0
        %782 = vmatpush1.msra.mxu0 %v762
        %783 = vmatprep.subr.mxu0 0.0
        %784 = vmatpush1.msra.mxu0 %v757
        %785 = vmatprep.subr.mxu0 0.0
        %786 = vmatpush1.msra.mxu0 %v752
        %787 = vmatprep.subr.mxu0 0.0
        %788 = vmatpush1.msra.mxu0 %v747
        %789 = vmatprep.subr.mxu0 0.0
        %790 = vmatpush1.msra.mxu0 %v742
        %791 = vmatprep.subr.mxu0 0.0
        %792 = vmatpush1.msra.mxu0 %v737
        %793 = vmatprep.subr.mxu0 0.0
        %794 = vmatpush1.msra.mxu0 %v732
        %795 = vmatprep.subr.mxu0 0.0
        %796 = vmatpush1.msra.mxu0 %v727
        %797 = vmatprep.subr.mxu0 0.0
        %798 = vmatpush1.msra.mxu0 %v722
        %799 = vmatprep.subr.mxu0 0.0
        %800 = vmatpush1.msra.mxu0 %v717
        %801 = vmatprep.subr.mxu0 0.0
        %802 = vmatpush1.msra.mxu0 %v712
        %803 = vmatprep.subr.mxu0 0.0
        %804 = vmatpush1.msra.mxu0 %v707
        %805 = vmatprep.subr.mxu0 0.0
        %806 = vmatpush1.msra.mxu0 %v702
        %807 = vmatprep.subr.mxu0 0.0
        %808 = vmatpush1.msra.mxu0 %v697
        %809 = vmatprep.subr.mxu0 0.0
        %810 = vmatpush1.msra.mxu0 %v692
        %811 = vmatprep.subr.mxu0 0.0
        %812 = vmatpush1.msra.mxu0 %v687
        %813 = vmatprep.subr.mxu0 0.0
        %814 = vmatpush2.msra.mxu0 0.0
        %815 = vmatprep.subr.mxu0 0.0
        %816 = vmatpush2.msra.mxu0 0.0
        %817 = vmatprep.subr.mxu0 0.0
        %818 = vmatpush2.msra.mxu0 0.0
        %819 = vmatprep.subr.mxu0 0.0
        %820 = vmatpush2.msra.mxu0 0.0
        %821 = vmatprep.subr.mxu0 0.0
        %822 = vmatpush2.msra.mxu0 0.0
        %823 = vmatprep.subr.mxu0 0.0
        %824 = vmatpush2.msra.mxu0 0.0
        %825 = vmatprep.subr.mxu0 0.0
        %826 = vmatpush2.msra.mxu0 0.0
        %827 = vmatprep.subr.mxu0 0.0
        %828 = vmatpush2.msra.mxu0 0.0
        %829 = vmatprep.subr.mxu0 0.0
        %830 = vmatpush2.msra.mxu0 0.0
        %831 = vmatprep.subr.mxu0 0.0
        %832 = vmatpush2.msra.mxu0 0.0
        %833 = vmatprep.subr.mxu0 0.0
        %834 = vmatpush2.msra.mxu0 0.0
        %835 = vmatprep.subr.mxu0 0.0
        %836 = vmatpush2.msra.mxu0 0.0
        %837 = vmatprep.subr.mxu0 0.0
        %838 = vmatpush2.msra.mxu0 0.0
        %839 = vmatprep.subr.mxu0 0.0
        %840 = vmatpush2.msra.mxu0 0.0
        %841 = vmatprep.subr.mxu0 0.0
        %842 = vmatpush2.msra.mxu0 0.0
        %843 = vmatprep.subr.mxu0 0.0
        %844 = vmatpush2.msra.mxu0 0.0
        %845 = vmatprep.mubr.f32.mxu0 0.0
        %846 = vmatmul.mubr.f32.gmra.mxu0 %v347
        %v847 = vpop.f32.mrf.mxu0
        %v848 = vadd.f32 0.0, %v847
        %v849 = vpop.f32.mrf.mxu0
        %850 = vmatprep.mubr.f32.mxu0 0.0
        %851 = vmatmul.mubr.f32.gmra.mxu0 %v348
        %v852 = vpop.f32.mrf.mxu0
        %v853 = vadd.f32 0.0, %v852
        %v854 = vpop.f32.mrf.mxu0
        %855 = vmatprep.mubr.f32.mxu0 0.0
        %856 = vmatmul.mubr.f32.gmra.mxu0 %v349
        %v857 = vpop.f32.mrf.mxu0
        %v858 = vadd.f32 0.0, %v857
        %v859 = vpop.f32.mrf.mxu0
        %860 = vmatprep.mubr.f32.mxu0 0.0
        %861 = vmatmul.mubr.f32.gmra.mxu0 %v350
        %v862 = vpop.f32.mrf.mxu0
        %v863 = vadd.f32 0.0, %v862
        %v864 = vpop.f32.mrf.mxu0
        %865 = vmatprep.mubr.f32.mxu0 0.0
        %866 = vmatmul.mubr.f32.gmra.mxu0 %v351
        %v867 = vpop.f32.mrf.mxu0
        %v868 = vadd.f32 0.0, %v867
        %v869 = vpop.f32.mrf.mxu0
        %870 = vmatprep.mubr.f32.mxu0 0.0
        %871 = vmatmul.mubr.f32.gmra.mxu0 %v352
        %v872 = vpop.f32.mrf.mxu0
        %v873 = vadd.f32 0.0, %v872
        %v874 = vpop.f32.mrf.mxu0
        %875 = vmatprep.mubr.f32.mxu0 0.0
        %876 = vmatmul.mubr.f32.gmra.mxu0 %v353
        %v877 = vpop.f32.mrf.mxu0
        %v878 = vadd.f32 0.0, %v877
        %v879 = vpop.f32.mrf.mxu0
        %880 = vmatprep.mubr.f32.mxu0 0.0
        %881 = vmatmul.mubr.f32.gmra.mxu0 %v354
        %v882 = vpop.f32.mrf.mxu0
        %v883 = vadd.f32 0.0, %v882
        %v884 = vpop.f32.mrf.mxu0
        %885 = vmatprep.mubr.f32.mxu0 0.0
        %886 = vmatmul.mubr.f32.gmra.mxu0 %v355
        %v887 = vpop.f32.mrf.mxu0
        %v888 = vadd.f32 0.0, %v887
        %v889 = vpop.f32.mrf.mxu0
        %890 = vmatprep.mubr.f32.mxu0 0.0
        %891 = vmatmul.mubr.f32.gmra.mxu0 %v356
        %v892 = vpop.f32.mrf.mxu0
        %v893 = vadd.f32 0.0, %v892
        %v894 = vpop.f32.mrf.mxu0
        %895 = vmatprep.mubr.f32.mxu0 0.0
        %896 = vmatmul.mubr.f32.gmra.mxu0 %v357
        %v897 = vpop.f32.mrf.mxu0
        %v898 = vadd.f32 0.0, %v897
        %v899 = vpop.f32.mrf.mxu0
        %900 = vmatprep.mubr.f32.mxu0 0.0
        %901 = vmatmul.mubr.f32.gmra.mxu0 %v358
        %v902 = vpop.f32.mrf.mxu0
        %v903 = vadd.f32 0.0, %v902
        %v904 = vpop.f32.mrf.mxu0
        %905 = vmatprep.mubr.f32.mxu0 0.0
        %906 = vmatmul.mubr.f32.gmra.mxu0 %v359
        %v907 = vpop.f32.mrf.mxu0
        %v908 = vadd.f32 0.0, %v907
        %v909 = vpop.f32.mrf.mxu0
        %910 = vmatprep.mubr.f32.mxu0 0.0
        %911 = vmatmul.mubr.f32.gmra.mxu0 %v360
        %v912 = vpop.f32.mrf.mxu0
        %v913 = vadd.f32 0.0, %v912
        %v914 = vpop.f32.mrf.mxu0
        %915 = vmatprep.mubr.f32.mxu0 0.0
        %916 = vmatmul.mubr.f32.gmra.mxu0 %v361
        %v917 = vpop.f32.mrf.mxu0
        %v918 = vadd.f32 0.0, %v917
        %v919 = vpop.f32.mrf.mxu0
        %920 = vmatprep.mubr.f32.mxu0 0.0
        %921 = vmatmul.mubr.f32.gmra.mxu0 %v362
        %v922 = vpop.f32.mrf.mxu0
        %v923 = vadd.f32 0.0, %v922
        %v924 = vpop.f32.mrf.mxu0
        %925 = vdwg.mxu0
        %v926 = vadd.f32 %v765, %v848
        %v927 = vadd.f32 %v766, %v853
        %v928 = vadd.f32 %v767, %v858
        %v929 = vadd.f32 %v768, %v863
        %v930 = vadd.f32 %v769, %v868
        %v931 = vadd.f32 %v770, %v873
        %v932 = vadd.f32 %v771, %v878
        %v933 = vadd.f32 %v772, %v883
        %v934 = vadd.f32 %v773, %v888
        %v935 = vadd.f32 %v774, %v893
        %v936 = vadd.f32 %v775, %v898
        %v937 = vadd.f32 %v776, %v903
        %v938 = vadd.f32 %v777, %v908
        %v939 = vadd.f32 %v778, %v913
        %v940 = vadd.f32 %v779, %v918
        %v941 = vadd.f32 %v780, %v923
        %942 = vst [vmem:[#allocation3] sm:$0xff] %v926
        %943 = vst [vmem:[#allocation3 + $0x8] sm:$0xff] %v927
        %944 = vst [vmem:[#allocation3 + $0x10] sm:$0xff] %v928
        %945 = vst [vmem:[#allocation3 + $0x18] sm:$0xff] %v929
        %946 = vst [vmem:[#allocation3 + $0x20] sm:$0xff] %v930
        %947 = vst [vmem:[#allocation3 + $0x28] sm:$0xff] %v931
        %948 = vst [vmem:[#allocation3 + $0x30] sm:$0xff] %v932
        %949 = vst [vmem:[#allocation3 + $0x38] sm:$0xff] %v933
        %950 = vst [vmem:[#allocation3 + $0x40] sm:$0xff] %v934
        %951 = vst [vmem:[#allocation3 + $0x48] sm:$0xff] %v935
        %952 = vst [vmem:[#allocation3 + $0x50] sm:$0xff] %v936
        %953 = vst [vmem:[#allocation3 + $0x58] sm:$0xff] %v937
        %954 = vst [vmem:[#allocation3 + $0x60] sm:$0xff] %v938
        %955 = vst [vmem:[#allocation3 + $0x68] sm:$0xff] %v939
        %956 = vst [vmem:[#allocation3 + $0x70] sm:$0xff] %v940
        %957 = vst [vmem:[#allocation3 + $0x78] sm:$0xff] %v941
        %p958 = scmp.eq.s32.totalorder %s31, 1
        // Predicated region
        $region49: #{tpu_custom_call.1} parent=31 // pred_check
          %p959 = pneg %p958
        $region50: #{tpu_custom_call.1} parent=31 // pred_check_branch
          %961 = sbr.rel (%p959) target = $region52
        $region51: #{tpu_custom_call.1} parent=31 // pred_region
          %v962 = vld [vmem:[#allocation2] sm:$0xff]
          %v963 = vld [vmem:[#allocation2 + $0x8] sm:$0xff]
          %v964 = vld [vmem:[#allocation2 + $0x10] sm:$0xff]
          %v965 = vld [vmem:[#allocation2 + $0x18] sm:$0xff]
          %v966 = vld [vmem:[#allocation2 + $0x20] sm:$0xff]
          %v967 = vld [vmem:[#allocation2 + $0x28] sm:$0xff]
          %v968 = vld [vmem:[#allocation2 + $0x30] sm:$0xff]
          %v969 = vld [vmem:[#allocation2 + $0x38] sm:$0xff]
          %v970 = vld [vmem:[#allocation2 + $0x40] sm:$0xff]
          %v971 = vld [vmem:[#allocation2 + $0x48] sm:$0xff]
          %v972 = vld [vmem:[#allocation2 + $0x50] sm:$0xff]
          %v973 = vld [vmem:[#allocation2 + $0x58] sm:$0xff]
          %v974 = vld [vmem:[#allocation2 + $0x60] sm:$0xff]
          %v975 = vld [vmem:[#allocation2 + $0x68] sm:$0xff]
          %v976 = vld [vmem:[#allocation2 + $0x70] sm:$0xff]
          %v977 = vld [vmem:[#allocation2 + $0x78] sm:$0xff]
          %v978 = vadd.f32 %v363, %v962
          %v979 = vadd.f32 %v364, %v963
          %v980 = vadd.f32 %v365, %v964
          %v981 = vadd.f32 %v366, %v965
          %v982 = vadd.f32 %v367, %v966
          %v983 = vadd.f32 %v368, %v967
          %v984 = vadd.f32 %v369, %v968
          %v985 = vadd.f32 %v370, %v969
          %v986 = vadd.f32 %v371, %v970
          %v987 = vadd.f32 %v372, %v971
          %v988 = vadd.f32 %v373, %v972
          %v989 = vadd.f32 %v374, %v973
          %v990 = vadd.f32 %v375, %v974
          %v991 = vadd.f32 %v376, %v975
          %v992 = vadd.f32 %v377, %v976
          %v993 = vadd.f32 %v378, %v977
          %v994 = vld [vmem:[#allocation3] sm:$0xff]
          %v995 = vld [vmem:[#allocation3 + $0x8] sm:$0xff]
          %v996 = vld [vmem:[#allocation3 + $0x10] sm:$0xff]
          %v997 = vld [vmem:[#allocation3 + $0x18] sm:$0xff]
          %v998 = vld [vmem:[#allocation3 + $0x20] sm:$0xff]
          %v999 = vld [vmem:[#allocation3 + $0x28] sm:$0xff]
          %v1000 = vld [vmem:[#allocation3 + $0x30] sm:$0xff]
          %v1001 = vld [vmem:[#allocation3 + $0x38] sm:$0xff]
          %v1002 = vld [vmem:[#allocation3 + $0x40] sm:$0xff]
          %v1003 = vld [vmem:[#allocation3 + $0x48] sm:$0xff]
          %v1004 = vld [vmem:[#allocation3 + $0x50] sm:$0xff]
          %v1005 = vld [vmem:[#allocation3 + $0x58] sm:$0xff]
          %v1006 = vld [vmem:[#allocation3 + $0x60] sm:$0xff]
          %v1007 = vld [vmem:[#allocation3 + $0x68] sm:$0xff]
          %v1008 = vld [vmem:[#allocation3 + $0x70] sm:$0xff]
          %v1009 = vld [vmem:[#allocation3 + $0x78] sm:$0xff]
          %v1010 = vadd.f32 %v978, %v994
          %v1011 = vadd.f32 %v979, %v995
          %v1012 = vadd.f32 %v980, %v996
          %v1013 = vadd.f32 %v981, %v997
          %v1014 = vadd.f32 %v982, %v998
          %v1015 = vadd.f32 %v983, %v999
          %v1016 = vadd.f32 %v984, %v1000
          %v1017 = vadd.f32 %v985, %v1001
          %v1018 = vadd.f32 %v986, %v1002
          %v1019 = vadd.f32 %v987, %v1003
          %v1020 = vadd.f32 %v988, %v1004
          %v1021 = vadd.f32 %v989, %v1005
          %v1022 = vadd.f32 %v990, %v1006
          %v1023 = vadd.f32 %v991, %v1007
          %v1024 = vadd.f32 %v992, %v1008
          %v1025 = vadd.f32 %v993, %v1009
          %v1026 = vmul.f32 %v1010, 0.33333334
          %v1027 = vmul.f32 %v1011, 0.33333334
          %v1028 = vmul.f32 %v1012, 0.33333334
          %v1029 = vmul.f32 %v1013, 0.33333334
          %v1030 = vmul.f32 %v1014, 0.33333334
          %v1031 = vmul.f32 %v1015, 0.33333334
          %v1032 = vmul.f32 %v1016, 0.33333334
          %v1033 = vmul.f32 %v1017, 0.33333334
          %v1034 = vmul.f32 %v1018, 0.33333334
          %v1035 = vmul.f32 %v1019, 0.33333334
          %v1036 = vmul.f32 %v1020, 0.33333334
          %v1037 = vmul.f32 %v1021, 0.33333334
          %v1038 = vmul.f32 %v1022, 0.33333334
          %v1039 = vmul.f32 %v1023, 0.33333334
          %v1040 = vmul.f32 %v1024, 0.33333334
          %v1041 = vmul.f32 %v1025, 0.33333334
          %1042 = vst [vmem:[%s286] sm:$0xff] %v1026
          %1043 = vst [vmem:[%s286 + $0x8] sm:$0xff] %v1027
          %1044 = vst [vmem:[%s286 + $0x10] sm:$0xff] %v1028
          %1045 = vst [vmem:[%s286 + $0x18] sm:$0xff] %v1029
          %1046 = vst [vmem:[%s286 + $0x20] sm:$0xff] %v1030
          %1047 = vst [vmem:[%s286 + $0x28] sm:$0xff] %v1031
          %1048 = vst [vmem:[%s286 + $0x30] sm:$0xff] %v1032
          %1049 = vst [vmem:[%s286 + $0x38] sm:$0xff] %v1033
          %1050 = vst [vmem:[%s286 + $0x40] sm:$0xff] %v1034
          %1051 = vst [vmem:[%s286 + $0x48] sm:$0xff] %v1035
          %1052 = vst [vmem:[%s286 + $0x50] sm:$0xff] %v1036
          %1053 = vst [vmem:[%s286 + $0x58] sm:$0xff] %v1037
          %1054 = vst [vmem:[%s286 + $0x60] sm:$0xff] %v1038
          %1055 = vst [vmem:[%s286 + $0x68] sm:$0xff] %v1039
          %1056 = vst [vmem:[%s286 + $0x70] sm:$0xff] %v1040
          %1057 = vst [vmem:[%s286 + $0x78] sm:$0xff] %v1041
          %1058 = vst [vmem:[%s293] sm:$0xff] %v962
          %1059 = vst [vmem:[%s293 + $0x8] sm:$0xff] %v963
          %1060 = vst [vmem:[%s293 + $0x10] sm:$0xff] %v964
          %1061 = vst [vmem:[%s293 + $0x18] sm:$0xff] %v965
          %1062 = vst [vmem:[%s293 + $0x20] sm:$0xff] %v966
          %1063 = vst [vmem:[%s293 + $0x28] sm:$0xff] %v967
          %1064 = vst [vmem:[%s293 + $0x30] sm:$0xff] %v968
          %1065 = vst [vmem:[%s293 + $0x38] sm:$0xff] %v969
          %1066 = vst [vmem:[%s293 + $0x40] sm:$0xff] %v970
          %1067 = vst [vmem:[%s293 + $0x48] sm:$0xff] %v971
          %1068 = vst [vmem:[%s293 + $0x50] sm:$0xff] %v972
          %1069 = vst [vmem:[%s293 + $0x58] sm:$0xff] %v973
          %1070 = vst [vmem:[%s293 + $0x60] sm:$0xff] %v974
          %1071 = vst [vmem:[%s293 + $0x68] sm:$0xff] %v975
          %1072 = vst [vmem:[%s293 + $0x70] sm:$0xff] %v976
          %1073 = vst [vmem:[%s293 + $0x78] sm:$0xff] %v977
        $region52: #{tpu_custom_call.1} parent=31 // pred_fallthru
          _
        %s1074 = sand.u32 %s121, 1
        %s1075 = scalar_lea.sflag [#allocation6], %s1074
        %s1076 = sand.u32 %s121, 1
        %s1077 = smul.addr %s1076, 128
        %s1078 = scalar_lea.vmem [#allocation10], %s1077
        %s1079 = sand.u32 %s147, 1
        %s1080 = scalar_lea.sflag [#allocation12], %s1079
        %s1081 = sand.u32 %s147, 1
        %s1082 = smul.addr %s1081, 128
        %s1083 = scalar_lea.vmem [#allocation11], %s1082
        // Predicated region
        $region53: #{tpu_custom_call.1} parent=31 // pred_check
          %p1084 = pneg %p131
        $region54: #{tpu_custom_call.1} parent=31 // pred_check_branch
          %1086 = sbr.rel (%p1084) target = $region56
        $region55: #{tpu_custom_call.1} parent=31 // pred_region
          %s1088 = ssub.s32 2048, 2048
          %1089 = vsyncadd %s1075, %s1088
          %s1090 = smul.addr %s30, 16
          %s1091 = smul.addr %s1090, 128
          %s1092 = scalar_lea.hbm %s3, %s1091
          %s1093 = sshll.u32 %s1078, 4
          %s1094 = int_to_ptr.vmem [resolvable:$true] %s1093
          %1099 = dma.vmem_to_hbm [thread:$0]  %s1094, 2048, %s1092, %s1075, 128, 128, 8
        $region56: #{tpu_custom_call.1} parent=31 // pred_fallthru
          _
        // Predicated region
        $region57: #{tpu_custom_call.1} parent=31 // pred_check
          %p1100 = pneg %p157
        $region58: #{tpu_custom_call.1} parent=31 // pred_check_branch
          %1102 = sbr.rel (%p1100) target = $region60
        $region59: #{tpu_custom_call.1} parent=31 // pred_region
          %s1104 = ssub.s32 2048, 2048
          %1105 = vsyncadd %s1080, %s1104
          %s1106 = smul.addr %s30, 16
          %s1107 = smul.addr %s1106, 128
          %s1108 = scalar_lea.hbm %s4, %s1107
          %s1109 = sshll.u32 %s1083, 4
          %s1110 = int_to_ptr.vmem [resolvable:$true] %s1109
          %1115 = dma.vmem_to_hbm [thread:$0]  %s1110, 2048, %s1108, %s1080, 128, 128, 8
        $region60: #{tpu_custom_call.1} parent=31 // pred_fallthru
          _
      $region32: #{tpu_custom_call.1} parent=5 // pred_fallthru
        _
      %p1116 = scmp.le.s32.totalorder 2, %s21
      // Predicated region
      $region61: #{tpu_custom_call.1} parent=5 // pred_check
        %p1117 = pneg %p1116
      $region62: #{tpu_custom_call.1} parent=5 // pred_check_branch
        %1119 = sbr.rel (%p1117) target = $region64
      $region63: #{tpu_custom_call.1} parent=5 // pred_region
        %s1120 = ssub.s32 %s21, 2
        // Predicated region
        $region65: #{tpu_custom_call.1} parent=63 // pred_check
          %p1121 = pneg %p137
        $region66: #{tpu_custom_call.1} parent=63 // pred_check_branch
          %1123 = sbr.rel (%p1121) target = $region68
        $region67: #{tpu_custom_call.1} parent=63 // pred_region
          %s1124 = sand.u32 %s122, 1
          %s1125 = scalar_lea.sflag [#allocation6], %s1124
          %s1126 = sand.u32 %s122, 1
          %s1127 = smul.addr %s1126, 128
          %s1128 = scalar_lea.vmem [#allocation10], %s1127
          %1129 = dma.done %s1125, 2048
        $region68: #{tpu_custom_call.1} parent=63 // pred_fallthru
          _
        // Predicated region
        $region69: #{tpu_custom_call.1} parent=63 // pred_check
          %p1130 = pneg %p163
        $region70: #{tpu_custom_call.1} parent=63 // pred_check_branch
          %1132 = sbr.rel (%p1130) target = $region72
        $region71: #{tpu_custom_call.1} parent=63 // pred_region
          %s1133 = sand.u32 %s148, 1
          %s1134 = scalar_lea.sflag [#allocation12], %s1133
          %s1135 = sand.u32 %s148, 1
          %s1136 = smul.addr %s1135, 128
          %s1137 = scalar_lea.vmem [#allocation11], %s1136
          %1138 = dma.done %s1134, 2048
        $region72: #{tpu_custom_call.1} parent=63 // pred_fallthru
          _
      $region64: #{tpu_custom_call.1} parent=5 // pred_fallthru
        _
    $region6: #{tpu_custom_call.1} parent=1 // loop_footer
      %s25 = sadd.s32 1, %s21
    $region7: #{tpu_custom_call.1} parent=1 // loop_footer_branch
      %20 = sbr.rel target = $region3
    $region8: #{tpu_custom_call.1} parent=1 // loop_exit
      _
    %1139 = vsyncpa [#allocation5], 1
    %s1140 = scalar_lea.sflag [#allocation5], 1
    %1141 = vsyncpa %s1140, 1
    %1142 = vsyncpa [#allocation8], 1
    %1143 = vsyncpa [#allocation6], 1
    %s1144 = scalar_lea.sflag [#allocation6], 1
    %1145 = vsyncpa %s1144, 1
    %1146 = vsyncpa [#allocation12], 1
    %s1147 = scalar_lea.sflag [#allocation12], 1
    %1148 = vsyncpa %s1147, 1

</llo_original>
